<compile_context>
chip_gen: v7x
topology: tpu7x:2x2x1
jax: 0.10.0
libtpu: 0.0.40
codegen_flags: <defaults>
</compile_context>

<pallas_src>
import functools

import jax
import jax.numpy as jnp
import numpy as np
from jax.experimental import pallas as pl
from jax.experimental.pallas import tpu as pltpu


def _round_up(n, m):
    return ((n + m - 1) // m) * m


def _choose_batch_tile(B, block_b):
    """Large batch tile (amortize ~0.35us/step pipeline overhead, fill MXU
    rows), but with <~12.5% zero-row padding and an even-ish grid so both
    v7x TensorCores get balanced work."""
    tb = _round_up(min(block_b, B), 8)
    while tb > 8:
        steps = -(-B // tb)
        pad = steps * tb - B
        balanced = steps >= 2 and (steps % 2 == 0 or steps >= 5)
        if balanced and pad * 8 <= B:
            break
        nxt = _round_up(max(tb // 2, 8), 8)
        if nxt == tb:
            break
        tb = nxt
    return tb


def encoder_kernel(x_ref, w1_ref, wh_ref, whead_ref, affine_ref, bhead_ref,
                   out_ref, *, eps):
    x = x_ref[...]                              # (TB, I), matmul dtype (bf16)
    xf = x.astype(jnp.float32)

    # norm = sqrt(sum(x^2, -1)) + 1e-6 ; the 1/norm scale is folded after the
    # first matmul (exact: fc1 is linear and the bias is added afterwards).
    # sqrt and approx-reciprocal both run on the (otherwise idle) EUP slot.
    sumsq = jnp.sum(xf * xf, axis=-1, keepdims=True)
    inv_norm = pl.reciprocal(jnp.sqrt(sumsq) + 1e-6, approx=True)    # (TB, 1)

    # F.dropout with training=False is the identity (eval-mode semantics).
    # TODO(synk): training-mode dropout would need pltpu.prng_seed + stateful_bernoulli.

    def swish(v):
        # v * sigmoid(v), keeping the divide off the VALU: exp -> EUP,
        # approximate reciprocal -> EUP (error ~2^-12, << bf16 matmul noise).
        return v * pl.reciprocal(1.0 + jnp.exp(-v), approx=True)

    def layer_norm(v, layer):
        # torch.nn.LayerNorm: biased variance, eps inside the sqrt.
        # Single-pass variance (mean(x^2) - mean(x)^2) is safe at eps=0.1;
        # revert to the two-pass form if eps is ever lowered toward 1e-5.
        mean = jnp.mean(v, axis=-1, keepdims=True)
        mean_sq = jnp.mean(v * v, axis=-1, keepdims=True)
        var = mean_sq - mean * mean
        gamma = affine_ref[5 + layer:6 + layer, :]
        beta = affine_ref[10 + layer:11 + layer, :]
        return (v - mean) * jax.lax.rsqrt(var + eps) * gamma + beta

    def lin(v, w):
        # MXU matmul: operands in the weight dtype (bf16), f32 accumulation.
        return jnp.dot(v.astype(w.dtype), w, preferred_element_type=jnp.float32)

    # Layer 1: fold the 1/norm scale into the (TB, H) matmul result.
    pre = lin(x, w1_ref[...]) * inv_norm + affine_ref[0:1, :]
    h = layer_norm(swish(pre), 0)

    # Layers 2..5 with a running residual sum (res = h1 + ... + h_{i-1}).
    res = h
    for i in range(4):
        pre = lin(h, wh_ref[i]) + affine_ref[i + 1:i + 2, :] + res
        h_new = layer_norm(swish(pre), i + 1)
        if i < 3:
            res = res + h_new
        h = h_new

    # Fused heads: one [H, 2L] matmul, one lane-dense (TB, 2L) store.
    # Clamp only the logvar half via a (1, 2L) lane mask (single vreg of mask
    # work per grid step; keeps the unmasked full-width store).
    out = lin(h, whead_ref[...]) + bhead_ref[...]
    two_latent = out_ref.shape[-1]
    latent = two_latent // 2
    col = jax.lax.broadcasted_iota(jnp.int32, (1, two_latent), 1)
    out = jnp.where(col >= latent, jnp.clip(out, -6.0, 6.0), out)
    out_ref[...] = out.astype(out_ref.dtype)


def pack_params(params, matmul_dtype=jnp.bfloat16):
    """Pack per-layer params into a few large arrays; weights in matmul_dtype."""
    packed = {
        "w1": params["w1"].astype(matmul_dtype),                          # (I, H)
        "wh": jnp.stack([params[f"w{i}"] for i in range(2, 6)]
                        ).astype(matmul_dtype),                           # (4, H, H)
        "whead": jnp.concatenate([params["wmu"], params["wlv"]],
                                 axis=1).astype(matmul_dtype),            # (H, 2L)
        # bias rows 0..4 | gamma rows 5..9 | beta rows 10..14 -> one slab.
        "affine": jnp.concatenate(
            [params[f"b{i}"] for i in range(1, 6)]
            + [params[f"g{i}"] for i in range(1, 6)]
            + [params[f"bt{i}"] for i in range(1, 6)],
            axis=0).astype(jnp.float32),                                  # (15, H)
        "bhead": jnp.concatenate([params["bmu"], params["blv"]],
                                 axis=1).astype(jnp.float32),             # (1, 2L)
    }
    return packed


def encoder_forward(x, packed, dropout_rate=0.0, *, eps=0.1, block_b=512,
                    out_dtype=jnp.float32):
    """Runs the Encoder forward; returns (mu, logvar).

    block_b: batch tile upper bound (multiple of 8).  512-1024 is a good
    sweep range on v5e/v6e/v7x -- total VMEM footprint stays < ~4 MiB.
    """
    del dropout_rate  # identity in eval mode
    B, input_dim = x.shape
    hidden = packed["w1"].shape[1]
    two_latent = packed["whead"].shape[1]
    latent = two_latent // 2
    matmul_dtype = packed["w1"].dtype

    # Ship x in the matmul dtype (bf16 on v6e/v7x): halves the dominant
    # per-row HBM traffic; the kernel upcasts to f32 for the L2-norm math.
    x = x.astype(matmul_dtype)

    tb = _choose_batch_tile(B, block_b)
    b_pad = _round_up(B, tb)
    if b_pad != B:
        x = jnp.pad(x, ((0, b_pad - B), (0, 0)))
    grid = (b_pad // tb,)

    resident2 = lambda i: (0, 0)      # same block every step -> stays in VMEM
    resident3 = lambda i: (0, 0, 0)

    flops = 2 * b_pad * (input_dim * hidden + 4 * hidden * hidden
                         + hidden * two_latent)
    transcendentals = b_pad * (10 * hidden + 5 + 2)   # swish exp+rcp, LN rsqrt, norm
    weight_bytes = sum(int(np.prod(packed[k].shape)) * packed[k].dtype.itemsize
                       for k in ("w1", "wh", "whead", "affine", "bhead"))
    bytes_accessed = (b_pad * input_dim * x.dtype.itemsize
                      + b_pad * two_latent * jnp.dtype(out_dtype).itemsize
                      + weight_bytes)

    out = pl.pallas_call(
        functools.partial(encoder_kernel, eps=eps),
        grid=grid,
        in_specs=[
            pl.BlockSpec((tb, input_dim), lambda i: (i, 0)),              # x tile
            pl.BlockSpec((input_dim, hidden), resident2),                 # w1
            pl.BlockSpec((4, hidden, hidden), resident3),                 # w2..w5
            pl.BlockSpec((hidden, two_latent), resident2),                # [wmu|wlv]
            pl.BlockSpec((15, hidden), resident2),                        # bias|gamma|beta
            pl.BlockSpec((1, two_latent), resident2),                     # [bmu|blv]
        ],
        out_specs=pl.BlockSpec((tb, two_latent), lambda i: (i, 0)),
        out_shape=jax.ShapeDtypeStruct((b_pad, two_latent), out_dtype),
        compiler_params=pltpu.CompilerParams(
            dimension_semantics=("parallel",)),                           # v7x megacore
        cost_estimate=pl.CostEstimate(flops=flops,
                                      transcendentals=transcendentals,
                                      bytes_accessed=bytes_accessed),
    )(x, packed["w1"], packed["wh"], packed["whead"],
      packed["affine"], packed["bhead"])

    mu = out[:B, :latent]
    logvar = out[:B, latent:]
    return mu, logvar


def init_params(key, input_dim, hidden_dim, latent_dim):
    """Deterministic PyTorch-style (uniform +/- 1/sqrt(fan_in)) Linear init."""
    keys = jax.random.split(key, 7)

    def linear(k, fan_in, fan_out):
        bound = 1.0 / np.sqrt(fan_in)
        kw, kb = jax.random.split(k)
        w = jax.random.uniform(kw, (fan_in, fan_out), jnp.float32, -bound, bound)
        b = jax.random.uniform(kb, (1, fan_out), jnp.float32, -bound, bound)
        return w, b

    p = {}
    dims = [(input_dim, hidden_dim)] + [(hidden_dim, hidden_dim)] * 4
    for i, (fi, fo) in enumerate(dims, start=1):
        w, b = linear(keys[i - 1], fi, fo)
        p[f"w{i}"], p[f"b{i}"] = w, b
        p[f"g{i}"] = jnp.ones((1, fo), jnp.float32)     # LayerNorm weight
        p[f"bt{i}"] = jnp.zeros((1, fo), jnp.float32)   # LayerNorm bias
    p["wmu"], p["bmu"] = linear(keys[5], hidden_dim, latent_dim)
    p["wlv"], p["blv"] = linear(keys[6], hidden_dim, latent_dim)
    return p


def _swish_ref(v):
    return v * jax.nn.sigmoid(v)


def _layer_norm_ref(v, gamma, beta, eps):
    mean = jnp.mean(v, axis=-1, keepdims=True)
    var = jnp.mean((v - mean) ** 2, axis=-1, keepdims=True)
    return (v - mean) * jax.lax.rsqrt(var + eps) * gamma + beta


def encoder_reference(x, params, *, eps=0.1, matmul_dtype=jnp.float32):
    """Pure-JAX reference of the PyTorch forward (optionally with the same
    bf16 input / matmul-operand quantization the kernel uses)."""
    x = x.astype(matmul_dtype).astype(jnp.float32)
    norm = jnp.sqrt(jnp.sum(x * x, axis=-1, keepdims=True)) + 1e-6
    x = x / norm

    def lin(v, w, b):
        return jnp.dot(v.astype(matmul_dtype), w.astype(matmul_dtype),
                       preferred_element_type=jnp.float32) + b

    h1 = _layer_norm_ref(_swish_ref(lin(x, params["w1"], params["b1"])),
                         params["g1"], params["bt1"], eps)
    h2 = _layer_norm_ref(_swish_ref(lin(h1, params["w2"], params["b2"]) + h1),
                         params["g2"], params["bt2"], eps)
    h3 = _layer_norm_ref(_swish_ref(lin(h2, params["w3"], params["b3"]) + h1 + h2),
                         params["g3"], params["bt3"], eps)
    h4 = _layer_norm_ref(_swish_ref(lin(h3, params["w4"], params["b4"])
                                    + h1 + h2 + h3),
                         params["g4"], params["bt4"], eps)
    h5 = _layer_norm_ref(_swish_ref(lin(h4, params["w5"], params["b5"])
                                    + h1 + h2 + h3 + h4),
                         params["g5"], params["bt5"], eps)
    mu = lin(h5, params["wmu"], params["bmu"])
    logvar = jnp.clip(lin(h5, params["wlv"], params["blv"]), -6.0, 6.0)
    return mu, logvar


if __name__ == "__main__":
    B, INPUT_DIM, HIDDEN_DIM, LATENT_DIM = 24, 256, 128, 64

    key = jax.random.PRNGKey(0)
    k_x, k_p = jax.random.split(key)
    x = jax.random.normal(k_x, (B, INPUT_DIM), dtype=jnp.float32)
    params = init_params(k_p, INPUT_DIM, HIDDEN_DIM, LATENT_DIM)

    # bf16 matmul operands (MXU-native on v6e/v7x), f32 everywhere else.
    packed = pack_params(params, matmul_dtype=jnp.bfloat16)
    # block_b=8 at this tiny demo batch so the grid actually has several steps
    # (production callers should leave the 512 default and sweep 512-1024).
    mu, logvar = encoder_forward(x, packed, dropout_rate=0.0, block_b=8)
    jax.block_until_ready((mu, logvar))
    assert mu.shape == (B, LATENT_DIM) and logvar.shape == (B, LATENT_DIM)

    # Check vs. a reference that applies the same bf16 quantization
    # (remaining deltas: approx-reciprocal in swish/norm, ~2^-12 relative).
    mu_q, lv_q = encoder_reference(x, params, matmul_dtype=jnp.bfloat16)
    np.testing.assert_allclose(np.asarray(mu), np.asarray(mu_q), atol=2e-2, rtol=2e-2)
    np.testing.assert_allclose(np.asarray(logvar), np.asarray(lv_q), atol=2e-2, rtol=2e-2)

    # Loose check vs. the full-f32 spec (bf16 quantization tolerance).
    mu_f, lv_f = encoder_reference(x, params)
    np.testing.assert_allclose(np.asarray(mu), np.asarray(mu_f), atol=7e-2, rtol=7e-2)
    np.testing.assert_allclose(np.asarray(logvar), np.asarray(lv_f), atol=7e-2, rtol=7e-2)

    print("KERNEL_OK")
</pallas_src>

<mosaic_0001>
module attributes {stable_mosaic.version = 11 : i64} {
  func.func @encoder_kernel(%arg0: i32, %arg1: memref<8x256xbf16, #tpu.memory_space<vmem>>, %arg2: memref<256x128xbf16, #tpu.memory_space<vmem>>, %arg3: memref<4x128x128xbf16, #tpu.memory_space<vmem>>, %arg4: memref<128x128xbf16, #tpu.memory_space<vmem>>, %arg5: memref<15x128xf32, #tpu.memory_space<vmem>>, %arg6: memref<1x128xf32, #tpu.memory_space<vmem>>, %arg7: memref<8x128xf32, #tpu.memory_space<vmem>>) attributes {dimension_semantics = [#tpu.dimension_semantics<parallel>], iteration_bounds = array<i64: 3>, scalar_prefetch = 0 : i64, scratch_operands = 0 : i64, tpu.core_type = #tpu.core_type<tc>, window_params = [{transform_indices = @transform_0, window_bounds = array<i64: 8, 256>}, {pipeline_mode = #tpu.pipeline_mode<synchronous>, transform_indices = @transform_1, window_bounds = array<i64: 256, 128>}, {pipeline_mode = #tpu.pipeline_mode<synchronous>, transform_indices = @transform_2, window_bounds = array<i64: 4, 128, 128>}, {pipeline_mode = #tpu.pipeline_mode<synchronous>, transform_indices = @transform_3, window_bounds = array<i64: 128, 128>}, {pipeline_mode = #tpu.pipeline_mode<synchronous>, transform_indices = @transform_4, window_bounds = array<i64: 15, 128>}, {pipeline_mode = #tpu.pipeline_mode<synchronous>, transform_indices = @transform_5, window_bounds = array<i64: 1, 128>}, {transform_indices = @transform_6, window_bounds = array<i64: 8, 128>}]} {
    %c0 = arith.constant 0 : index
    %c0_0 = arith.constant 0 : index
    %0 = vector.load %arg1[%c0, %c0_0] : memref<8x256xbf16, #tpu.memory_space<vmem>>, vector<8x256xbf16>
    %1 = arith.extf %0 : vector<8x256xbf16> to vector<8x256xf32>
    %2 = arith.mulf %1, %1 : vector<8x256xf32>
    %cst = arith.constant dense<0.000000e+00> : vector<8xf32>
    %3 = vector.multi_reduction <add>, %2, %cst [1] : vector<8x256xf32> to vector<8xf32>
    %4 = vector.shape_cast %3 : vector<8xf32> to vector<8x1xf32>
    %5 = math.sqrt %4 : vector<8x1xf32>
    %cst_1 = arith.constant 9.99999997E-7 : f32
    %6 = vector.broadcast %cst_1 : f32 to vector<8x1xf32>
    %7 = arith.addf %5, %6 : vector<8x1xf32>
    %8 = tpu.reciprocal %7 {approx = true} : vector<8x1xf32> -> vector<8x1xf32>
    %c0_2 = arith.constant 0 : index
    %c0_3 = arith.constant 0 : index
    %9 = vector.load %arg2[%c0_2, %c0_3] : memref<256x128xbf16, #tpu.memory_space<vmem>>, vector<256x128xbf16>
    %cst_4 = arith.constant dense<0.000000e+00> : vector<8x128xf32>
    %10 = tpu.matmul %0, %9, %cst_4 {dimension_numbers = #tpu.dot_dimension_numbers<[1], [0], [0], [1], [0, 0, 1, 1], [], []>} : vector<8x256xbf16>, vector<256x128xbf16>, vector<8x128xf32> -> vector<8x128xf32>
    %11 = vector.broadcast %8 : vector<8x1xf32> to vector<8x128xf32>
    %12 = arith.mulf %10, %11 : vector<8x128xf32>
    %c0_5 = arith.constant 0 : index
    %c0_6 = arith.constant 0 : index
    %13 = vector.load %arg5[%c0_5, %c0_6] : memref<15x128xf32, #tpu.memory_space<vmem>>, vector<1x128xf32>
    %14 = vector.broadcast %13 : vector<1x128xf32> to vector<8x128xf32>
    %15 = arith.addf %12, %14 : vector<8x128xf32>
    %cst_7 = arith.constant 0.000000e+00 : f32
    %16 = vector.broadcast %cst_7 : f32 to vector<8x128xf32>
    %17 = arith.subf %16, %15 : vector<8x128xf32>
    %18 = math.exp %17 : vector<8x128xf32>
    %cst_8 = arith.constant 1.000000e+00 : f32
    %19 = vector.broadcast %cst_8 : f32 to vector<8x128xf32>
    %20 = arith.addf %19, %18 : vector<8x128xf32>
    %21 = tpu.reciprocal %20 {approx = true} : vector<8x128xf32> -> vector<8x128xf32>
    %22 = arith.mulf %15, %21 : vector<8x128xf32>
    %cst_9 = arith.constant dense<0.000000e+00> : vector<8xf32>
    %23 = vector.multi_reduction <add>, %22, %cst_9 [1] : vector<8x128xf32> to vector<8xf32>
    %24 = vector.shape_cast %23 : vector<8xf32> to vector<8x1xf32>
    %cst_10 = arith.constant 1.280000e+02 : f32
    %25 = vector.broadcast %cst_10 : f32 to vector<8x1xf32>
    %26 = arith.divf %24, %25 : vector<8x1xf32>
    %27 = arith.mulf %22, %22 : vector<8x128xf32>
    %cst_11 = arith.constant dense<0.000000e+00> : vector<8xf32>
    %28 = vector.multi_reduction <add>, %27, %cst_11 [1] : vector<8x128xf32> to vector<8xf32>
    %29 = vector.shape_cast %28 : vector<8xf32> to vector<8x1xf32>
    %cst_12 = arith.constant 1.280000e+02 : f32
    %30 = vector.broadcast %cst_12 : f32 to vector<8x1xf32>
    %31 = arith.divf %29, %30 : vector<8x1xf32>
    %32 = arith.mulf %26, %26 : vector<8x1xf32>
    %33 = arith.subf %31, %32 : vector<8x1xf32>
    %c5 = arith.constant 5 : index
    %c0_13 = arith.constant 0 : index
    %34 = vector.load %arg5[%c5, %c0_13] : memref<15x128xf32, #tpu.memory_space<vmem>>, vector<1x128xf32>
    %c10 = arith.constant 10 : index
    %c0_14 = arith.constant 0 : index
    %35 = vector.load %arg5[%c10, %c0_14] : memref<15x128xf32, #tpu.memory_space<vmem>>, vector<1x128xf32>
    %36 = vector.broadcast %26 : vector<8x1xf32> to vector<8x128xf32>
    %37 = arith.subf %22, %36 : vector<8x128xf32>
    %cst_15 = arith.constant 1.000000e-01 : f32
    %38 = vector.broadcast %cst_15 : f32 to vector<8x1xf32>
    %39 = arith.addf %33, %38 : vector<8x1xf32>
    %40 = math.rsqrt %39 : vector<8x1xf32>
    %41 = vector.broadcast %40 : vector<8x1xf32> to vector<8x128xf32>
    %42 = arith.mulf %37, %41 : vector<8x128xf32>
    %43 = vector.broadcast %34 : vector<1x128xf32> to vector<8x128xf32>
    %44 = arith.mulf %42, %43 : vector<8x128xf32>
    %45 = vector.broadcast %35 : vector<1x128xf32> to vector<8x128xf32>
    %46 = arith.addf %44, %45 : vector<8x128xf32>
    %c0_16 = arith.constant 0 : index
    %c0_17 = arith.constant 0 : index
    %c0_18 = arith.constant 0 : index
    %47 = vector.load %arg3[%c0_16, %c0_17, %c0_18] : memref<4x128x128xbf16, #tpu.memory_space<vmem>>, vector<1x128x128xbf16>
    %48 = vector.shape_cast %47 : vector<1x128x128xbf16> to vector<128x128xbf16>
    %49 = arith.truncf %46 : vector<8x128xf32> to vector<8x128xbf16>
    %cst_19 = arith.constant dense<0.000000e+00> : vector<8x128xf32>
    %50 = tpu.matmul %49, %48, %cst_19 {dimension_numbers = #tpu.dot_dimension_numbers<[1], [0], [0], [1], [0, 0, 1, 1], [], []>} : vector<8x128xbf16>, vector<128x128xbf16>, vector<8x128xf32> -> vector<8x128xf32>
    %c1 = arith.constant 1 : index
    %c0_20 = arith.constant 0 : index
    %51 = vector.load %arg5[%c1, %c0_20] : memref<15x128xf32, #tpu.memory_space<vmem>>, vector<1x128xf32>
    %52 = vector.broadcast %51 : vector<1x128xf32> to vector<8x128xf32>
    %53 = arith.addf %50, %52 : vector<8x128xf32>
    %54 = arith.addf %53, %46 : vector<8x128xf32>
    %cst_21 = arith.constant 0.000000e+00 : f32
    %55 = vector.broadcast %cst_21 : f32 to vector<8x128xf32>
    %56 = arith.subf %55, %54 : vector<8x128xf32>
    %57 = math.exp %56 : vector<8x128xf32>
    %cst_22 = arith.constant 1.000000e+00 : f32
    %58 = vector.broadcast %cst_22 : f32 to vector<8x128xf32>
    %59 = arith.addf %58, %57 : vector<8x128xf32>
    %60 = tpu.reciprocal %59 {approx = true} : vector<8x128xf32> -> vector<8x128xf32>
    %61 = arith.mulf %54, %60 : vector<8x128xf32>
    %cst_23 = arith.constant dense<0.000000e+00> : vector<8xf32>
    %62 = vector.multi_reduction <add>, %61, %cst_23 [1] : vector<8x128xf32> to vector<8xf32>
    %63 = vector.shape_cast %62 : vector<8xf32> to vector<8x1xf32>
    %cst_24 = arith.constant 1.280000e+02 : f32
    %64 = vector.broadcast %cst_24 : f32 to vector<8x1xf32>
    %65 = arith.divf %63, %64 : vector<8x1xf32>
    %66 = arith.mulf %61, %61 : vector<8x128xf32>
    %cst_25 = arith.constant dense<0.000000e+00> : vector<8xf32>
    %67 = vector.multi_reduction <add>, %66, %cst_25 [1] : vector<8x128xf32> to vector<8xf32>
    %68 = vector.shape_cast %67 : vector<8xf32> to vector<8x1xf32>
    %cst_26 = arith.constant 1.280000e+02 : f32
    %69 = vector.broadcast %cst_26 : f32 to vector<8x1xf32>
    %70 = arith.divf %68, %69 : vector<8x1xf32>
    %71 = arith.mulf %65, %65 : vector<8x1xf32>
    %72 = arith.subf %70, %71 : vector<8x1xf32>
    %c6 = arith.constant 6 : index
    %c0_27 = arith.constant 0 : index
    %73 = vector.load %arg5[%c6, %c0_27] : memref<15x128xf32, #tpu.memory_space<vmem>>, vector<1x128xf32>
    %c11 = arith.constant 11 : index
    %c0_28 = arith.constant 0 : index
    %74 = vector.load %arg5[%c11, %c0_28] : memref<15x128xf32, #tpu.memory_space<vmem>>, vector<1x128xf32>
    %75 = vector.broadcast %65 : vector<8x1xf32> to vector<8x128xf32>
    %76 = arith.subf %61, %75 : vector<8x128xf32>
    %cst_29 = arith.constant 1.000000e-01 : f32
    %77 = vector.broadcast %cst_29 : f32 to vector<8x1xf32>
    %78 = arith.addf %72, %77 : vector<8x1xf32>
    %79 = math.rsqrt %78 : vector<8x1xf32>
    %80 = vector.broadcast %79 : vector<8x1xf32> to vector<8x128xf32>
    %81 = arith.mulf %76, %80 : vector<8x128xf32>
    %82 = vector.broadcast %73 : vector<1x128xf32> to vector<8x128xf32>
    %83 = arith.mulf %81, %82 : vector<8x128xf32>
    %84 = vector.broadcast %74 : vector<1x128xf32> to vector<8x128xf32>
    %85 = arith.addf %83, %84 : vector<8x128xf32>
    %86 = arith.addf %46, %85 : vector<8x128xf32>
    %c1_30 = arith.constant 1 : index
    %c0_31 = arith.constant 0 : index
    %c0_32 = arith.constant 0 : index
    %87 = vector.load %arg3[%c1_30, %c0_31, %c0_32] : memref<4x128x128xbf16, #tpu.memory_space<vmem>>, vector<1x128x128xbf16>
    %88 = vector.shape_cast %87 : vector<1x128x128xbf16> to vector<128x128xbf16>
    %89 = arith.truncf %85 : vector<8x128xf32> to vector<8x128xbf16>
    %cst_33 = arith.constant dense<0.000000e+00> : vector<8x128xf32>
    %90 = tpu.matmul %89, %88, %cst_33 {dimension_numbers = #tpu.dot_dimension_numbers<[1], [0], [0], [1], [0, 0, 1, 1], [], []>} : vector<8x128xbf16>, vector<128x128xbf16>, vector<8x128xf32> -> vector<8x128xf32>
    %c2 = arith.constant 2 : index
    %c0_34 = arith.constant 0 : index
    %91 = vector.load %arg5[%c2, %c0_34] : memref<15x128xf32, #tpu.memory_space<vmem>>, vector<1x128xf32>
    %92 = vector.broadcast %91 : vector<1x128xf32> to vector<8x128xf32>
    %93 = arith.addf %90, %92 : vector<8x128xf32>
    %94 = arith.addf %93, %86 : vector<8x128xf32>
    %cst_35 = arith.constant 0.000000e+00 : f32
    %95 = vector.broadcast %cst_35 : f32 to vector<8x128xf32>
    %96 = arith.subf %95, %94 : vector<8x128xf32>
    %97 = math.exp %96 : vector<8x128xf32>
    %cst_36 = arith.constant 1.000000e+00 : f32
    %98 = vector.broadcast %cst_36 : f32 to vector<8x128xf32>
    %99 = arith.addf %98, %97 : vector<8x128xf32>
    %100 = tpu.reciprocal %99 {approx = true} : vector<8x128xf32> -> vector<8x128xf32>
    %101 = arith.mulf %94, %100 : vector<8x128xf32>
    %cst_37 = arith.constant dense<0.000000e+00> : vector<8xf32>
    %102 = vector.multi_reduction <add>, %101, %cst_37 [1] : vector<8x128xf32> to vector<8xf32>
    %103 = vector.shape_cast %102 : vector<8xf32> to vector<8x1xf32>
    %cst_38 = arith.constant 1.280000e+02 : f32
    %104 = vector.broadcast %cst_38 : f32 to vector<8x1xf32>
    %105 = arith.divf %103, %104 : vector<8x1xf32>
    %106 = arith.mulf %101, %101 : vector<8x128xf32>
    %cst_39 = arith.constant dense<0.000000e+00> : vector<8xf32>
    %107 = vector.multi_reduction <add>, %106, %cst_39 [1] : vector<8x128xf32> to vector<8xf32>
    %108 = vector.shape_cast %107 : vector<8xf32> to vector<8x1xf32>
    %cst_40 = arith.constant 1.280000e+02 : f32
    %109 = vector.broadcast %cst_40 : f32 to vector<8x1xf32>
    %110 = arith.divf %108, %109 : vector<8x1xf32>
    %111 = arith.mulf %105, %105 : vector<8x1xf32>
    %112 = arith.subf %110, %111 : vector<8x1xf32>
    %c7 = arith.constant 7 : index
    %c0_41 = arith.constant 0 : index
    %113 = vector.load %arg5[%c7, %c0_41] : memref<15x128xf32, #tpu.memory_space<vmem>>, vector<1x128xf32>
    %c12 = arith.constant 12 : index
    %c0_42 = arith.constant 0 : index
    %114 = vector.load %arg5[%c12, %c0_42] : memref<15x128xf32, #tpu.memory_space<vmem>>, vector<1x128xf32>
    %115 = vector.broadcast %105 : vector<8x1xf32> to vector<8x128xf32>
    %116 = arith.subf %101, %115 : vector<8x128xf32>
    %cst_43 = arith.constant 1.000000e-01 : f32
    %117 = vector.broadcast %cst_43 : f32 to vector<8x1xf32>
    %118 = arith.addf %112, %117 : vector<8x1xf32>
    %119 = math.rsqrt %118 : vector<8x1xf32>
    %120 = vector.broadcast %119 : vector<8x1xf32> to vector<8x128xf32>
    %121 = arith.mulf %116, %120 : vector<8x128xf32>
    %122 = vector.broadcast %113 : vector<1x128xf32> to vector<8x128xf32>
    %123 = arith.mulf %121, %122 : vector<8x128xf32>
    %124 = vector.broadcast %114 : vector<1x128xf32> to vector<8x128xf32>
    %125 = arith.addf %123, %124 : vector<8x128xf32>
    %126 = arith.addf %86, %125 : vector<8x128xf32>
    %c2_44 = arith.constant 2 : index
    %c0_45 = arith.constant 0 : index
    %c0_46 = arith.constant 0 : index
    %127 = vector.load %arg3[%c2_44, %c0_45, %c0_46] : memref<4x128x128xbf16, #tpu.memory_space<vmem>>, vector<1x128x128xbf16>
    %128 = vector.shape_cast %127 : vector<1x128x128xbf16> to vector<128x128xbf16>
    %129 = arith.truncf %125 : vector<8x128xf32> to vector<8x128xbf16>
    %cst_47 = arith.constant dense<0.000000e+00> : vector<8x128xf32>
    %130 = tpu.matmul %129, %128, %cst_47 {dimension_numbers = #tpu.dot_dimension_numbers<[1], [0], [0], [1], [0, 0, 1, 1], [], []>} : vector<8x128xbf16>, vector<128x128xbf16>, vector<8x128xf32> -> vector<8x128xf32>
    %c3 = arith.constant 3 : index
    %c0_48 = arith.constant 0 : index
    %131 = vector.load %arg5[%c3, %c0_48] : memref<15x128xf32, #tpu.memory_space<vmem>>, vector<1x128xf32>
    %132 = vector.broadcast %131 : vector<1x128xf32> to vector<8x128xf32>
    %133 = arith.addf %130, %132 : vector<8x128xf32>
    %134 = arith.addf %133, %126 : vector<8x128xf32>
    %cst_49 = arith.constant 0.000000e+00 : f32
    %135 = vector.broadcast %cst_49 : f32 to vector<8x128xf32>
    %136 = arith.subf %135, %134 : vector<8x128xf32>
    %137 = math.exp %136 : vector<8x128xf32>
    %cst_50 = arith.constant 1.000000e+00 : f32
    %138 = vector.broadcast %cst_50 : f32 to vector<8x128xf32>
    %139 = arith.addf %138, %137 : vector<8x128xf32>
    %140 = tpu.reciprocal %139 {approx = true} : vector<8x128xf32> -> vector<8x128xf32>
    %141 = arith.mulf %134, %140 : vector<8x128xf32>
    %cst_51 = arith.constant dense<0.000000e+00> : vector<8xf32>
    %142 = vector.multi_reduction <add>, %141, %cst_51 [1] : vector<8x128xf32> to vector<8xf32>
    %143 = vector.shape_cast %142 : vector<8xf32> to vector<8x1xf32>
    %cst_52 = arith.constant 1.280000e+02 : f32
    %144 = vector.broadcast %cst_52 : f32 to vector<8x1xf32>
    %145 = arith.divf %143, %144 : vector<8x1xf32>
    %146 = arith.mulf %141, %141 : vector<8x128xf32>
    %cst_53 = arith.constant dense<0.000000e+00> : vector<8xf32>
    %147 = vector.multi_reduction <add>, %146, %cst_53 [1] : vector<8x128xf32> to vector<8xf32>
    %148 = vector.shape_cast %147 : vector<8xf32> to vector<8x1xf32>
    %cst_54 = arith.constant 1.280000e+02 : f32
    %149 = vector.broadcast %cst_54 : f32 to vector<8x1xf32>
    %150 = arith.divf %148, %149 : vector<8x1xf32>
    %151 = arith.mulf %145, %145 : vector<8x1xf32>
    %152 = arith.subf %150, %151 : vector<8x1xf32>
    %c8 = arith.constant 8 : index
    %c0_55 = arith.constant 0 : index
    %153 = vector.load %arg5[%c8, %c0_55] : memref<15x128xf32, #tpu.memory_space<vmem>>, vector<1x128xf32>
    %c13 = arith.constant 13 : index
    %c0_56 = arith.constant 0 : index
    %154 = vector.load %arg5[%c13, %c0_56] : memref<15x128xf32, #tpu.memory_space<vmem>>, vector<1x128xf32>
    %155 = vector.broadcast %145 : vector<8x1xf32> to vector<8x128xf32>
    %156 = arith.subf %141, %155 : vector<8x128xf32>
    %cst_57 = arith.constant 1.000000e-01 : f32
    %157 = vector.broadcast %cst_57 : f32 to vector<8x1xf32>
    %158 = arith.addf %152, %157 : vector<8x1xf32>
    %159 = math.rsqrt %158 : vector<8x1xf32>
    %160 = vector.broadcast %159 : vector<8x1xf32> to vector<8x128xf32>
    %161 = arith.mulf %156, %160 : vector<8x128xf32>
    %162 = vector.broadcast %153 : vector<1x128xf32> to vector<8x128xf32>
    %163 = arith.mulf %161, %162 : vector<8x128xf32>
    %164 = vector.broadcast %154 : vector<1x128xf32> to vector<8x128xf32>
    %165 = arith.addf %163, %164 : vector<8x128xf32>
    %166 = arith.addf %126, %165 : vector<8x128xf32>
    %c3_58 = arith.constant 3 : index
    %c0_59 = arith.constant 0 : index
    %c0_60 = arith.constant 0 : index
    %167 = vector.load %arg3[%c3_58, %c0_59, %c0_60] : memref<4x128x128xbf16, #tpu.memory_space<vmem>>, vector<1x128x128xbf16>
    %168 = vector.shape_cast %167 : vector<1x128x128xbf16> to vector<128x128xbf16>
    %169 = arith.truncf %165 : vector<8x128xf32> to vector<8x128xbf16>
    %cst_61 = arith.constant dense<0.000000e+00> : vector<8x128xf32>
    %170 = tpu.matmul %169, %168, %cst_61 {dimension_numbers = #tpu.dot_dimension_numbers<[1], [0], [0], [1], [0, 0, 1, 1], [], []>} : vector<8x128xbf16>, vector<128x128xbf16>, vector<8x128xf32> -> vector<8x128xf32>
    %c4 = arith.constant 4 : index
    %c0_62 = arith.constant 0 : index
    %171 = vector.load %arg5[%c4, %c0_62] : memref<15x128xf32, #tpu.memory_space<vmem>>, vector<1x128xf32>
    %172 = vector.broadcast %171 : vector<1x128xf32> to vector<8x128xf32>
    %173 = arith.addf %170, %172 : vector<8x128xf32>
    %174 = arith.addf %173, %166 : vector<8x128xf32>
    %cst_63 = arith.constant 0.000000e+00 : f32
    %175 = vector.broadcast %cst_63 : f32 to vector<8x128xf32>
    %176 = arith.subf %175, %174 : vector<8x128xf32>
    %177 = math.exp %176 : vector<8x128xf32>
    %cst_64 = arith.constant 1.000000e+00 : f32
    %178 = vector.broadcast %cst_64 : f32 to vector<8x128xf32>
    %179 = arith.addf %178, %177 : vector<8x128xf32>
    %180 = tpu.reciprocal %179 {approx = true} : vector<8x128xf32> -> vector<8x128xf32>
    %181 = arith.mulf %174, %180 : vector<8x128xf32>
    %cst_65 = arith.constant dense<0.000000e+00> : vector<8xf32>
    %182 = vector.multi_reduction <add>, %181, %cst_65 [1] : vector<8x128xf32> to vector<8xf32>
    %183 = vector.shape_cast %182 : vector<8xf32> to vector<8x1xf32>
    %cst_66 = arith.constant 1.280000e+02 : f32
    %184 = vector.broadcast %cst_66 : f32 to vector<8x1xf32>
    %185 = arith.divf %183, %184 : vector<8x1xf32>
    %186 = arith.mulf %181, %181 : vector<8x128xf32>
    %cst_67 = arith.constant dense<0.000000e+00> : vector<8xf32>
    %187 = vector.multi_reduction <add>, %186, %cst_67 [1] : vector<8x128xf32> to vector<8xf32>
    %188 = vector.shape_cast %187 : vector<8xf32> to vector<8x1xf32>
    %cst_68 = arith.constant 1.280000e+02 : f32
    %189 = vector.broadcast %cst_68 : f32 to vector<8x1xf32>
    %190 = arith.divf %188, %189 : vector<8x1xf32>
    %191 = arith.mulf %185, %185 : vector<8x1xf32>
    %192 = arith.subf %190, %191 : vector<8x1xf32>
    %c9 = arith.constant 9 : index
    %c0_69 = arith.constant 0 : index
    %193 = vector.load %arg5[%c9, %c0_69] : memref<15x128xf32, #tpu.memory_space<vmem>>, vector<1x128xf32>
    %c14 = arith.constant 14 : index
    %c0_70 = arith.constant 0 : index
    %194 = vector.load %arg5[%c14, %c0_70] : memref<15x128xf32, #tpu.memory_space<vmem>>, vector<1x128xf32>
    %195 = vector.broadcast %185 : vector<8x1xf32> to vector<8x128xf32>
    %196 = arith.subf %181, %195 : vector<8x128xf32>
    %cst_71 = arith.constant 1.000000e-01 : f32
    %197 = vector.broadcast %cst_71 : f32 to vector<8x1xf32>
    %198 = arith.addf %192, %197 : vector<8x1xf32>
    %199 = math.rsqrt %198 : vector<8x1xf32>
    %200 = vector.broadcast %199 : vector<8x1xf32> to vector<8x128xf32>
    %201 = arith.mulf %196, %200 : vector<8x128xf32>
    %202 = vector.broadcast %193 : vector<1x128xf32> to vector<8x128xf32>
    %203 = arith.mulf %201, %202 : vector<8x128xf32>
    %204 = vector.broadcast %194 : vector<1x128xf32> to vector<8x128xf32>
    %205 = arith.addf %203, %204 : vector<8x128xf32>
    %c0_72 = arith.constant 0 : index
    %c0_73 = arith.constant 0 : index
    %206 = vector.load %arg4[%c0_72, %c0_73] : memref<128x128xbf16, #tpu.memory_space<vmem>>, vector<128x128xbf16>
    %207 = arith.truncf %205 : vector<8x128xf32> to vector<8x128xbf16>
    %cst_74 = arith.constant dense<0.000000e+00> : vector<8x128xf32>
    %208 = tpu.matmul %207, %206, %cst_74 {dimension_numbers = #tpu.dot_dimension_numbers<[1], [0], [0], [1], [0, 0, 1, 1], [], []>} : vector<8x128xbf16>, vector<128x128xbf16>, vector<8x128xf32> -> vector<8x128xf32>
    %c0_75 = arith.constant 0 : index
    %c0_76 = arith.constant 0 : index
    %209 = vector.load %arg6[%c0_75, %c0_76] : memref<1x128xf32, #tpu.memory_space<vmem>>, vector<1x128xf32>
    %210 = vector.broadcast %209 : vector<1x128xf32> to vector<8x128xf32>
    %211 = arith.addf %208, %210 : vector<8x128xf32>
    %212 = tpu.iota {dimensions = array<i32: 1>} : vector<1x128xi32>
    %c64_i32 = arith.constant 64 : i32
    %213 = vector.broadcast %c64_i32 : i32 to vector<1x128xi32>
    %214 = arith.cmpi sge, %212, %213 : vector<1x128xi32>
    %cst_77 = arith.constant -6.000000e+00 : f32
    %cst_78 = arith.constant 6.000000e+00 : f32
    %215 = vector.broadcast %cst_77 : f32 to vector<8x128xf32>
    %216 = arith.maximumf %215, %211 : vector<8x128xf32>
    %217 = vector.broadcast %cst_78 : f32 to vector<8x128xf32>
    %218 = arith.minimumf %217, %216 : vector<8x128xf32>
    %219 = vector.shape_cast %214 : vector<1x128xi1> to vector<1x128xi1>
    %220 = vector.broadcast %219 : vector<1x128xi1> to vector<8x128xi1>
    %221 = arith.select %220, %218, %211 : vector<8x128xi1>, vector<8x128xf32>
    %c0_79 = arith.constant 0 : index
    %c0_80 = arith.constant 0 : index
    %222 = vector.load %arg7[%c0_79, %c0_80] : memref<8x128xf32, #tpu.memory_space<vmem>>, vector<8x128xf32>
    tpu.vector_store %arg7[%c0_79, %c0_80], %221 {strides = array<i32>} : memref<8x128xf32, #tpu.memory_space<vmem>>, vector<8x128xf32>,
    return
  }
  func.func @transform_0(%arg0: i32) -> (i32, i32) {
    %c0_i32 = arith.constant 0 : i32
    %c0_i32_0 = arith.constant 0 : i32
    return %arg0, %c0_i32 : i32, i32
  }
  func.func @transform_1(%arg0: i32) -> (i32, i32) {
    %c0_i32 = arith.constant 0 : i32
    %c0_i32_0 = arith.constant 0 : i32
    %c0_i32_1 = arith.constant 0 : i32
    return %c0_i32, %c0_i32_0 : i32, i32
  }
  func.func @transform_2(%arg0: i32) -> (i32, i32, i32) {
    %c0_i32 = arith.constant 0 : i32
    %c0_i32_0 = arith.constant 0 : i32
    %c0_i32_1 = arith.constant 0 : i32
    %c0_i32_2 = arith.constant 0 : i32
    return %c0_i32, %c0_i32_0, %c0_i32_1 : i32, i32, i32
  }
  func.func @transform_3(%arg0: i32) -> (i32, i32) {
    %c0_i32 = arith.constant 0 : i32
    %c0_i32_0 = arith.constant 0 : i32
    %c0_i32_1 = arith.constant 0 : i32
    return %c0_i32, %c0_i32_0 : i32, i32
  }
  func.func @transform_4(%arg0: i32) -> (i32, i32) {
    %c0_i32 = arith.constant 0 : i32
    %c0_i32_0 = arith.constant 0 : i32
    %c0_i32_1 = arith.constant 0 : i32
    return %c0_i32, %c0_i32_0 : i32, i32
  }
  func.func @transform_5(%arg0: i32) -> (i32, i32) {
    %c0_i32 = arith.constant 0 : i32
    %c0_i32_0 = arith.constant 0 : i32
    %c0_i32_1 = arith.constant 0 : i32
    return %c0_i32, %c0_i32_0 : i32, i32
  }
  func.func @transform_6(%arg0: i32) -> (i32, i32) {
    %c0_i32 = arith.constant 0 : i32
    %c0_i32_0 = arith.constant 0 : i32
    return %arg0, %c0_i32 : i32, i32
  }
}

</mosaic_0001>

<llo_original>
// kernel: tpu_custom_call.1
$region0: #{tpu_custom_call.1}
  #allocation0 [shape = 'u32[]', space=smem, size = 0x4, offset = 0x4, fixed_abs, tag = 'smem constant byte address 0x4 - core index']
  #allocation1 [shape = 'u32[144,128]{1,0:T(1,128)}', space=vmem, size = 0x12000, scoped, tag = 'internal scratch']
  %s0 = inlined_call_operand.hbm [shape: bf16[24,256], index: 0, kind: input, shape index: {}]
  %s1 = inlined_call_operand.hbm [shape: bf16[256,128], index: 1, kind: input, shape index: {}]
  %s2 = inlined_call_operand.hbm [shape: bf16[4,128,128], index: 2, kind: input, shape index: {}]
  %s3 = inlined_call_operand.hbm [shape: bf16[128,128], index: 3, kind: input, shape index: {}]
  %s4 = inlined_call_operand.hbm [shape: f32[15,128], index: 4, kind: input, shape index: {}]
  %s5 = inlined_call_operand.vmem [shape: f32[1,128], index: 5, kind: input, shape index: {}]
  %s6 = inlined_call_operand.hbm [shape: f32[24,128], index: 6, kind: output, shape index: {}]
  %s7 = sld [smem:[#allocation0]]
  $region77: #{tpu_custom_call.1} parent=0
    _
  %s9 = ssub.s32 1, %s7
  %s10 = scalar_select 0, %s9, %s7
  $region1: #{tpu_custom_call.1} parent=0
    #allocation2 [shape = 'u8[8192]{0}', space=vmem, size = 0x2000, scoped, tag = 'input window, operand 0']
    #allocation3 [shape = 's32[2]{0}', space=sflag, size = 0x8, scoped, tag = 'scoped memory for tpu_custom_call.1']
    #allocation4 [shape = 's32[2]{0}', space=sflag, size = 0x8, scoped, tag = 'scoped memory for tpu_custom_call.1']
    #allocation5 [shape = 'u8[65536]{0}', space=vmem, size = 0x10000, scoped, tag = 'input window, operand 1, single buffered']
    #allocation6 [shape = 's32[1]{0}', space=sflag, size = 0x4, scoped, tag = 'scoped memory for tpu_custom_call.1']
    #allocation7 [shape = 'u8[131072]{0}', space=vmem, size = 0x20000, scoped, tag = 'input window, operand 2, single buffered']
    #allocation8 [shape = 'u8[32768]{0}', space=vmem, size = 0x8000, scoped, tag = 'input window, operand 3, single buffered']
    #allocation9 [shape = 's32[1]{0}', space=sflag, size = 0x4, scoped, tag = 'scoped memory for tpu_custom_call.1']
    #allocation10 [shape = 'u8[8192]{0}', space=vmem, size = 0x2000, scoped, tag = 'input window, operand 4, single buffered']
    #allocation11 [shape = 'u8[8192]{0}', space=vmem, size = 0x2000, scoped, tag = 'output window, operand 0']
    %11 = vsyncpa [#allocation3], 0
    %s12 = scalar_lea.sflag [#allocation3], 1
    %13 = vsyncpa %s12, 0
    %14 = vsyncpa [#allocation6], 0
    %15 = vsyncpa [#allocation9], 0
    %16 = vsyncpa [#allocation4], 0
    %s17 = scalar_lea.sflag [#allocation4], 1
    %18 = vsyncpa %s17, 0
    loop: start=0, step=1, limit=5
    $region2: #{tpu_custom_call.1} parent=1 // loop_pre_header
      _
    $region3: #{tpu_custom_call.1} parent=1 // loop_header
      %s20 = sphi 0, %s24
      %p21 = scmp.ge.s32.totalorder %s20, 5
      %s30 = sphi 0, %s32
      %s33 = sphi 0, %s30
      %s34 = sphi 0, %s33
      %s50 = sphi 0, %s34
      %s54 = sphi 0, %s54
      %s56 = sphi 0, %s54
      %s57 = sphi 0, %s56
      %s71 = sphi 0, %s57
      %s75 = sphi 0, %s75
      %s77 = sphi 0, %s75
      %s78 = sphi 0, %s77
      %s92 = sphi 0, %s78
      %s96 = sphi 0, %s96
      %s98 = sphi 0, %s96
      %s99 = sphi 0, %s98
      %s113 = sphi 0, %s99
      %s117 = sphi 0, %s117
      %s119 = sphi 0, %s117
      %s120 = sphi 0, %s119
      %s134 = sphi 0, %s120
      %s138 = sphi 0, %s138
      %s140 = sphi 0, %s138
      %s141 = sphi 0, %s140
      %s155 = sphi 0, %s141
      %s161 = sphi 0, %s163
      %s164 = sphi 0, %s161
      %s165 = sphi 0, %s164
      %s181 = sphi 0, %s165
    $region4: #{tpu_custom_call.1} parent=1 // loop_header_branch
      %23 = sbr.rel (%p21) target = $region8
    $region5: #{tpu_custom_call.1} parent=1 // loop_body
      %s25 = ssub.s32 %s20, 1
      %s26 = ssub.s32 %s20, 2
      %s27 = sadd.s32 %s20, 1
      %s28 = ssub.s32 %s20, %s27
      %p29 = scmp.eq.s32.totalorder %s28, 0
      %s31 = sadd.s32 %s30, 1
      %s32 = scalar_select %p29, %s30, %s31
      %p35 = pneg %p29
      %p36 = scmp.eq.s32.totalorder %s20, 2
      %p37 = por %p35, %p36
      %p38 = scmp.ne.s32.totalorder %s30, %s33
      %p39 = scmp.eq.s32.totalorder %s20, 0
      %p40 = por %p38, %p39
      %p41 = scmp.ne.s32.totalorder %s30, %s33
      %p42 = scmp.eq.s32.totalorder %s25, 2
      %p43 = por %p41, %p42
      %p44 = scmp.ne.s32.totalorder %s33, %s34
      %p45 = scmp.eq.s32.totalorder %s25, 0
      %p46 = por %p44, %p45
      %p47 = scmp.ne.s32.totalorder %s33, %s34
      %p48 = scmp.eq.s32.totalorder %s26, 2
      %p49 = por %p47, %p48
      %p51 = scmp.ne.s32.totalorder %s34, %s50
      %p52 = scmp.eq.s32.totalorder %s26, 0
      %p53 = por %p51, %p52
      %s55 = sadd.s32 %s54, 1
      %p58 = scmp.eq.s32.totalorder %s20, 2
      %p59 = scmp.ne.s32.totalorder %s54, %s56
      %p60 = scmp.eq.s32.totalorder %s20, 0
      %p61 = por %p59, %p60
      %p62 = scmp.ne.s32.totalorder %s54, %s56
      %p63 = scmp.eq.s32.totalorder %s25, 2
      %p64 = por %p62, %p63
      %p65 = scmp.ne.s32.totalorder %s56, %s57
      %p66 = scmp.eq.s32.totalorder %s25, 0
      %p67 = por %p65, %p66
      %p68 = scmp.ne.s32.totalorder %s56, %s57
      %p69 = scmp.eq.s32.totalorder %s26, 2
      %p70 = por %p68, %p69
      %p72 = scmp.ne.s32.totalorder %s57, %s71
      %p73 = scmp.eq.s32.totalorder %s26, 0
      %p74 = por %p72, %p73
      %s76 = sadd.s32 %s75, 1
      %p79 = scmp.eq.s32.totalorder %s20, 2
      %p80 = scmp.ne.s32.totalorder %s75, %s77
      %p81 = scmp.eq.s32.totalorder %s20, 0
      %p82 = por %p80, %p81
      %p83 = scmp.ne.s32.totalorder %s75, %s77
      %p84 = scmp.eq.s32.totalorder %s25, 2
      %p85 = por %p83, %p84
      %p86 = scmp.ne.s32.totalorder %s77, %s78
      %p87 = scmp.eq.s32.totalorder %s25, 0
      %p88 = por %p86, %p87
      %p89 = scmp.ne.s32.totalorder %s77, %s78
      %p90 = scmp.eq.s32.totalorder %s26, 2
      %p91 = por %p89, %p90
      %p93 = scmp.ne.s32.totalorder %s78, %s92
      %p94 = scmp.eq.s32.totalorder %s26, 0
      %p95 = por %p93, %p94
      %s97 = sadd.s32 %s96, 1
      %p100 = scmp.eq.s32.totalorder %s20, 2
      %p101 = scmp.ne.s32.totalorder %s96, %s98
      %p102 = scmp.eq.s32.totalorder %s20, 0
      %p103 = por %p101, %p102
      %p104 = scmp.ne.s32.totalorder %s96, %s98
      %p105 = scmp.eq.s32.totalorder %s25, 2
      %p106 = por %p104, %p105
      %p107 = scmp.ne.s32.totalorder %s98, %s99
      %p108 = scmp.eq.s32.totalorder %s25, 0
      %p109 = por %p107, %p108
      %p110 = scmp.ne.s32.totalorder %s98, %s99
      %p111 = scmp.eq.s32.totalorder %s26, 2
      %p112 = por %p110, %p111
      %p114 = scmp.ne.s32.totalorder %s99, %s113
      %p115 = scmp.eq.s32.totalorder %s26, 0
      %p116 = por %p114, %p115
      %s118 = sadd.s32 %s117, 1
      %p121 = scmp.eq.s32.totalorder %s20, 2
      %p122 = scmp.ne.s32.totalorder %s117, %s119
      %p123 = scmp.eq.s32.totalorder %s20, 0
      %p124 = por %p122, %p123
      %p125 = scmp.ne.s32.totalorder %s117, %s119
      %p126 = scmp.eq.s32.totalorder %s25, 2
      %p127 = por %p125, %p126
      %p128 = scmp.ne.s32.totalorder %s119, %s120
      %p129 = scmp.eq.s32.totalorder %s25, 0
      %p130 = por %p128, %p129
      %p131 = scmp.ne.s32.totalorder %s119, %s120
      %p132 = scmp.eq.s32.totalorder %s26, 2
      %p133 = por %p131, %p132
      %p135 = scmp.ne.s32.totalorder %s120, %s134
      %p136 = scmp.eq.s32.totalorder %s26, 0
      %p137 = por %p135, %p136
      %s139 = sadd.s32 %s138, 1
      %p142 = scmp.eq.s32.totalorder %s20, 2
      %p143 = scmp.ne.s32.totalorder %s138, %s140
      %p144 = scmp.eq.s32.totalorder %s20, 0
      %p145 = por %p143, %p144
      %p146 = scmp.ne.s32.totalorder %s138, %s140
      %p147 = scmp.eq.s32.totalorder %s25, 2
      %p148 = por %p146, %p147
      %p149 = scmp.ne.s32.totalorder %s140, %s141
      %p150 = scmp.eq.s32.totalorder %s25, 0
      %p151 = por %p149, %p150
      %p152 = scmp.ne.s32.totalorder %s140, %s141
      %p153 = scmp.eq.s32.totalorder %s26, 2
      %p154 = por %p152, %p153
      %p156 = scmp.ne.s32.totalorder %s141, %s155
      %p157 = scmp.eq.s32.totalorder %s26, 0
      %p158 = por %p156, %p157
      %s159 = ssub.s32 %s20, %s27
      %p160 = scmp.eq.s32.totalorder %s159, 0
      %s162 = sadd.s32 %s161, 1
      %s163 = scalar_select %p160, %s161, %s162
      %p166 = pneg %p160
      %p167 = scmp.eq.s32.totalorder %s20, 2
      %p168 = por %p166, %p167
      %p169 = scmp.ne.s32.totalorder %s161, %s164
      %p170 = scmp.eq.s32.totalorder %s20, 0
      %p171 = por %p169, %p170
      %p172 = scmp.ne.s32.totalorder %s161, %s164
      %p173 = scmp.eq.s32.totalorder %s25, 2
      %p174 = por %p172, %p173
      %p175 = scmp.ne.s32.totalorder %s164, %s165
      %p176 = scmp.eq.s32.totalorder %s25, 0
      %p177 = por %p175, %p176
      %p178 = scmp.ne.s32.totalorder %s164, %s165
      %p179 = scmp.eq.s32.totalorder %s26, 2
      %p180 = por %p178, %p179
      %p182 = scmp.ne.s32.totalorder %s165, %s181
      %p183 = scmp.eq.s32.totalorder %s26, 0
      %p184 = por %p182, %p183
      %p185 = scmp.le.s32.totalorder 1, %s20
      %p186 = scmp.lt.s32.totalorder %s20, 4
      %p187 = pnand %p185, %p186
      %p188 = pneg %p187
      // Predicated region
      $region9: #{tpu_custom_call.1} parent=5 // pred_check
        _
      $region10: #{tpu_custom_call.1} parent=5 // pred_check_branch
        %190 = sbr.rel (%p187) target = $region12
      $region11: #{tpu_custom_call.1} parent=5 // pred_region
        %s191 = ssub.s32 %s20, 1
        // Predicated region
        $region13: #{tpu_custom_call.1} parent=11 // pred_check
          %p192 = pneg %p67
        $region14: #{tpu_custom_call.1} parent=11 // pred_check_branch
          %194 = sbr.rel (%p192) target = $region16
        $region15: #{tpu_custom_call.1} parent=11 // pred_region
          %s196 = ssub.s32 2048, 2048
          %197 = vsyncadd [#allocation6], %s196
          %s198 = sshll.u32 [#allocation5], 4
          %s199 = int_to_ptr.vmem [resolvable:$true] %s198
          %204 = dma.hbm_to_vmem [thread:$0]  %s1, 2048, %s199, [#allocation6], 64, 64, 4
        $region16: #{tpu_custom_call.1} parent=11 // pred_fallthru
          _
        // Predicated region
        $region17: #{tpu_custom_call.1} parent=11 // pred_check
          %p205 = pneg %p88
        $region18: #{tpu_custom_call.1} parent=11 // pred_check_branch
          %207 = sbr.rel (%p205) target = $region20
        $region19: #{tpu_custom_call.1} parent=11 // pred_region
          %s209 = ssub.s32 4096, 4096
          %210 = vsyncadd [#allocation6], %s209
          %s211 = sshll.u32 [#allocation7], 4
          %s212 = int_to_ptr.vmem [resolvable:$true] %s211
          %217 = dma.hbm_to_vmem [thread:$0]  %s2, 4096, %s212, [#allocation6], 64, 64, 4
        $region20: #{tpu_custom_call.1} parent=11 // pred_fallthru
          _
        // Predicated region
        $region21: #{tpu_custom_call.1} parent=11 // pred_check
          %p218 = pneg %p109
        $region22: #{tpu_custom_call.1} parent=11 // pred_check_branch
          %220 = sbr.rel (%p218) target = $region24
        $region23: #{tpu_custom_call.1} parent=11 // pred_region
          %s222 = ssub.s32 1024, 1024
          %223 = vsyncadd [#allocation9], %s222
          %s224 = sshll.u32 [#allocation8], 4
          %s225 = int_to_ptr.vmem [resolvable:$true] %s224
          %230 = dma.hbm_to_vmem [thread:$0]  %s3, 1024, %s225, [#allocation9], 64, 64, 4
        $region24: #{tpu_custom_call.1} parent=11 // pred_fallthru
          _
        // Predicated region
        $region25: #{tpu_custom_call.1} parent=11 // pred_check
          %p231 = pneg %p130
        $region26: #{tpu_custom_call.1} parent=11 // pred_check_branch
          %233 = sbr.rel (%p231) target = $region28
        $region27: #{tpu_custom_call.1} parent=11 // pred_region
          %s235 = ssub.s32 256, 256
          %236 = vsyncadd [#allocation9], %s235
          %s237 = sshll.u32 [#allocation10], 4
          %s238 = int_to_ptr.vmem [resolvable:$true] %s237
          %243 = dma.hbm_to_vmem [thread:$0]  %s4, 256, %s238, [#allocation9], 128, 128, 8
        $region28: #{tpu_custom_call.1} parent=11 // pred_fallthru
          _
        // Predicated region
        $region29: #{tpu_custom_call.1} parent=11 // pred_check
          %p244 = pneg %p151
        $region30: #{tpu_custom_call.1} parent=11 // pred_check_branch
          %246 = sbr.rel (%p244) target = $region32
        $region31: #{tpu_custom_call.1} parent=11 // pred_region
          _
        $region32: #{tpu_custom_call.1} parent=11 // pred_fallthru
          _
      $region12: #{tpu_custom_call.1} parent=5 // pred_fallthru
        _
      %p247 = scmp.lt.s32.totalorder %s20, 3
      // Predicated region
      $region33: #{tpu_custom_call.1} parent=5 // pred_check
        %p248 = pneg %p247
      $region34: #{tpu_custom_call.1} parent=5 // pred_check_branch
        %250 = sbr.rel (%p248) target = $region36
      $region35: #{tpu_custom_call.1} parent=5 // pred_region
        // Predicated region
        $region37: #{tpu_custom_call.1} parent=35 // pred_check
          %p251 = pneg %p40
        $region38: #{tpu_custom_call.1} parent=35 // pred_check_branch
          %253 = sbr.rel (%p251) target = $region40
        $region39: #{tpu_custom_call.1} parent=35 // pred_region
          %s254 = sand.u32 %s30, 1
          %s255 = scalar_lea.sflag [#allocation3], %s254
          %s256 = sand.u32 %s30, 1
          %s257 = smul.addr %s256, 8
          %s258 = scalar_lea.vmem [#allocation2], %s257
          %s260 = ssub.s32 128, 128
          %261 = vsyncadd %s255, %s260
          %s262 = smul.addr %s20, 2
          %s263 = smul.addr %s262, 64
          %s264 = scalar_lea.hbm %s0, %s263
          %s266 = sshll.u32 %s258, 4
          %s267 = int_to_ptr.vmem [resolvable:$true] %s266
          %269 = dma.hbm_to_vmem [thread:$0]  %s264, 128, %s267, %s255
        $region40: #{tpu_custom_call.1} parent=35 // pred_fallthru
          _
      $region36: #{tpu_custom_call.1} parent=5 // pred_fallthru
        _
      %p270 = scmp.le.s32.totalorder 1, %s20
      %p271 = scmp.lt.s32.totalorder %s20, 4
      %p272 = pnand %p270, %p271
      %p273 = pneg %p272
      // Predicated region
      $region41: #{tpu_custom_call.1} parent=5 // pred_check
        _
      $region42: #{tpu_custom_call.1} parent=5 // pred_check_branch
        %275 = sbr.rel (%p272) target = $region44
      $region43: #{tpu_custom_call.1} parent=5 // pred_region
        %s276 = ssub.s32 %s20, 1
        %s277 = sand.u32 %s33, 1
        %s278 = scalar_lea.sflag [#allocation3], %s277
        %s279 = sand.u32 %s33, 1
        %s280 = smul.addr %s279, 8
        %s281 = scalar_lea.vmem [#allocation2], %s280
        // Predicated region
        $region45: #{tpu_custom_call.1} parent=43 // pred_check
          %p282 = pneg %p46
        $region46: #{tpu_custom_call.1} parent=43 // pred_check_branch
          %284 = sbr.rel (%p282) target = $region48
        $region47: #{tpu_custom_call.1} parent=43 // pred_region
          %285 = dma.done %s278, 128
        $region48: #{tpu_custom_call.1} parent=43 // pred_fallthru
          _
        // Predicated region
        $region49: #{tpu_custom_call.1} parent=43 // pred_check
          %p286 = pneg %p67
        $region50: #{tpu_custom_call.1} parent=43 // pred_check_branch
          %288 = sbr.rel (%p286) target = $region52
        $region51: #{tpu_custom_call.1} parent=43 // pred_region
          %289 = dma.done [#allocation6], 2048
        $region52: #{tpu_custom_call.1} parent=43 // pred_fallthru
          _
        // Predicated region
        $region53: #{tpu_custom_call.1} parent=43 // pred_check
          %p290 = pneg %p88
        $region54: #{tpu_custom_call.1} parent=43 // pred_check_branch
          %292 = sbr.rel (%p290) target = $region56
        $region55: #{tpu_custom_call.1} parent=43 // pred_region
          %293 = dma.done [#allocation6], 4096
        $region56: #{tpu_custom_call.1} parent=43 // pred_fallthru
          _
        // Predicated region
        $region57: #{tpu_custom_call.1} parent=43 // pred_check
          %p294 = pneg %p109
        $region58: #{tpu_custom_call.1} parent=43 // pred_check_branch
          %296 = sbr.rel (%p294) target = $region60
        $region59: #{tpu_custom_call.1} parent=43 // pred_region
          %297 = dma.done [#allocation9], 1024
        $region60: #{tpu_custom_call.1} parent=43 // pred_fallthru
          _
        // Predicated region
        $region61: #{tpu_custom_call.1} parent=43 // pred_check
          %p298 = pneg %p130
        $region62: #{tpu_custom_call.1} parent=43 // pred_check_branch
          %300 = sbr.rel (%p298) target = $region64
        $region63: #{tpu_custom_call.1} parent=43 // pred_region
          %301 = dma.done [#allocation9], 256
        $region64: #{tpu_custom_call.1} parent=43 // pred_fallthru
          _
        %s302 = sand.u32 %s33, 1
        %s303 = scalar_lea.sflag [#allocation3], %s302
        %s304 = sand.u32 %s33, 1
        %s305 = smul.addr %s304, 8
        %s306 = scalar_lea.vmem [#allocation2], %s305
        %p307 = pneg %p46
        %p308 = pneg %p43
        %p309 = pneg %p67
        %p310 = pneg %p64
        %p311 = pneg %p88
        %p312 = pneg %p85
        %p313 = pneg %p109
        %p314 = pneg %p106
        %p315 = pneg %p130
        %p316 = pneg %p127
        %p317 = pneg %p151
        %p318 = pneg %p148
        %p319 = pneg %p177
        %p320 = pneg %p174
        %s321 = sand.u32 %s164, 1
        %s322 = scalar_lea.sflag [#allocation4], %s321
        %s323 = sand.u32 %s164, 1
        %s324 = smul.addr %s323, 8
        %s325 = scalar_lea.vmem [#allocation11], %s324
        %v327 = vld [vmem:[%s281] sm:$0xff]
        %v328 = vunpack.c.l.bf16 %v327
        %v329 = vunpack.c.h.bf16 %v327
        %v330 = vmul.f32 %v328, %v328
        %v331 = vmul.f32 %v329, %v329
        %v332 = vadd.f32 %v330, %v331
        %333 = vadd.xlane.f32.xlu0 %v332
        %v334 = vpop.xlane.xlu0 %333
        %v335 = vrsqrt.pop %v334
        %v336 = vmul.f32 %v334, %v335
        %vm337 = vcmp.eq.f32.partialorder %v334, inf
        %v338 = vsel %vm337, %v334, %v336
        %vm339 = vcmp.eq.f32.partialorder %v334, 0.0
        %v340 = vand.u32 %v334, 2147483648
        %v341 = vsel %vm339, %v340, %v338
        %v342 = vadd.f32 %v341, 1e-06
        %v343 = vrcp.pop %v342
        %v344 = vld [vmem:[#allocation5] sm:$0xf]
        %v345 = vld [vmem:[#allocation5 + $0x4] sm:$0xf]
        %v346 = vld [vmem:[#allocation5 + $0x8] sm:$0xf]
        %v347 = vld [vmem:[#allocation5 + $0xc] sm:$0xf]
        %v348 = vld [vmem:[#allocation5 + $0x10] sm:$0xf]
        %v349 = vld [vmem:[#allocation5 + $0x14] sm:$0xf]
        %v350 = vld [vmem:[#allocation5 + $0x18] sm:$0xf]
        %v351 = vld [vmem:[#allocation5 + $0x1c] sm:$0xf]
        %v352 = vld [vmem:[#allocation5 + $0x20] sm:$0xf]
        %v353 = vld [vmem:[#allocation5 + $0x24] sm:$0xf]
        %v354 = vld [vmem:[#allocation5 + $0x28] sm:$0xf]
        %v355 = vld [vmem:[#allocation5 + $0x2c] sm:$0xf]
        %v356 = vld [vmem:[#allocation5 + $0x30] sm:$0xf]
        %v357 = vld [vmem:[#allocation5 + $0x34] sm:$0xf]
        %v358 = vld [vmem:[#allocation5 + $0x38] sm:$0xf]
        %v359 = vld [vmem:[#allocation5 + $0x3c] sm:$0xf]
        %v360 = vld [vmem:[#allocation5 + $0x40] sm:$0xf]
        %v361 = vld [vmem:[#allocation5 + $0x44] sm:$0xf]
        %v362 = vld [vmem:[#allocation5 + $0x48] sm:$0xf]
        %v363 = vld [vmem:[#allocation5 + $0x4c] sm:$0xf]
        %v364 = vld [vmem:[#allocation5 + $0x50] sm:$0xf]
        %v365 = vld [vmem:[#allocation5 + $0x54] sm:$0xf]
        %v366 = vld [vmem:[#allocation5 + $0x58] sm:$0xf]
        %v367 = vld [vmem:[#allocation5 + $0x5c] sm:$0xf]
        %v368 = vld [vmem:[#allocation5 + $0x60] sm:$0xf]
        %v369 = vld [vmem:[#allocation5 + $0x64] sm:$0xf]
        %v370 = vld [vmem:[#allocation5 + $0x68] sm:$0xf]
        %v371 = vld [vmem:[#allocation5 + $0x6c] sm:$0xf]
        %v372 = vld [vmem:[#allocation5 + $0x70] sm:$0xf]
        %v373 = vld [vmem:[#allocation5 + $0x74] sm:$0xf]
        %v374 = vld [vmem:[#allocation5 + $0x78] sm:$0xf]
        %v375 = vld [vmem:[#allocation5 + $0x7c] sm:$0xf]
        %v377 = vunpack.c.l.b16 %v327
        %v378 = vunpack.c.h.b16 %v327
        %v379 = vpack.c.b16 %v377, %v377
        %v380 = vpack.c.b16 %v378, %v378
        %v415 = vunpack.c.l.b16 %v344
        %v416 = vunpack.c.l.b16 %v345
        %v417 = vunpack.c.l.b16 %v346
        %v418 = vunpack.c.l.b16 %v347
        %v419 = vunpack.c.l.b16 %v348
        %v420 = vunpack.c.l.b16 %v349
        %v421 = vunpack.c.l.b16 %v350
        %v422 = vunpack.c.l.b16 %v351
        %v423 = vunpack.c.l.b16 %v352
        %v424 = vunpack.c.l.b16 %v353
        %v425 = vunpack.c.l.b16 %v354
        %v426 = vunpack.c.l.b16 %v355
        %v427 = vunpack.c.l.b16 %v356
        %v428 = vunpack.c.l.b16 %v357
        %v429 = vunpack.c.l.b16 %v358
        %v430 = vunpack.c.l.b16 %v359
        %v431 = vunpack.c.l.b16 %v360
        %v432 = vunpack.c.l.b16 %v361
        %v433 = vunpack.c.l.b16 %v362
        %v434 = vunpack.c.l.b16 %v363
        %v435 = vunpack.c.l.b16 %v364
        %v436 = vunpack.c.l.b16 %v365
        %v437 = vunpack.c.l.b16 %v366
        %v438 = vunpack.c.l.b16 %v367
        %v439 = vunpack.c.l.b16 %v368
        %v440 = vunpack.c.l.b16 %v369
        %v441 = vunpack.c.l.b16 %v370
        %v442 = vunpack.c.l.b16 %v371
        %v443 = vunpack.c.l.b16 %v372
        %v444 = vunpack.c.l.b16 %v373
        %v445 = vunpack.c.l.b16 %v374
        %v446 = vunpack.c.l.b16 %v375
        %v447 = vpack.c.b16 %v416, %v415
        %v448 = vpack.c.b16 %v418, %v417
        %v449 = vpack.c.b16 %v420, %v419
        %v450 = vpack.c.b16 %v422, %v421
        %v451 = vpack.c.b16 %v424, %v423
        %v452 = vpack.c.b16 %v426, %v425
        %v453 = vpack.c.b16 %v428, %v427
        %v454 = vpack.c.b16 %v430, %v429
        %v455 = vpack.c.b16 %v432, %v431
        %v456 = vpack.c.b16 %v434, %v433
        %v457 = vpack.c.b16 %v436, %v435
        %v458 = vpack.c.b16 %v438, %v437
        %v459 = vpack.c.b16 %v440, %v439
        %v460 = vpack.c.b16 %v442, %v441
        %v461 = vpack.c.b16 %v444, %v443
        %v462 = vpack.c.b16 %v446, %v445
        %479 = vmatprep.subr.bf16.mxu0 0
        %480 = vmatpush1.bf16.msra.mxu0 %v447
        %481 = vmatprep.subr.bf16.mxu0 0
        %482 = vmatpush1.bf16.msra.mxu0 %v448
        %483 = vmatprep.subr.bf16.mxu0 0
        %484 = vmatpush1.bf16.msra.mxu0 %v449
        %485 = vmatprep.subr.bf16.mxu0 0
        %486 = vmatpush1.bf16.msra.mxu0 %v450
        %487 = vmatprep.subr.bf16.mxu0 0
        %488 = vmatpush1.bf16.msra.mxu0 %v451
        %489 = vmatprep.subr.bf16.mxu0 0
        %490 = vmatpush1.bf16.msra.mxu0 %v452
        %491 = vmatprep.subr.bf16.mxu0 0
        %492 = vmatpush1.bf16.msra.mxu0 %v453
        %493 = vmatprep.subr.bf16.mxu0 0
        %494 = vmatpush1.bf16.msra.mxu0 %v454
        %495 = vmatprep.subr.bf16.mxu0 0
        %496 = vmatpush1.bf16.msra.mxu0 %v455
        %497 = vmatprep.subr.bf16.mxu0 0
        %498 = vmatpush1.bf16.msra.mxu0 %v456
        %499 = vmatprep.subr.bf16.mxu0 0
        %500 = vmatpush1.bf16.msra.mxu0 %v457
        %501 = vmatprep.subr.bf16.mxu0 0
        %502 = vmatpush1.bf16.msra.mxu0 %v458
        %503 = vmatprep.subr.bf16.mxu0 0
        %504 = vmatpush1.bf16.msra.mxu0 %v459
        %505 = vmatprep.subr.bf16.mxu0 0
        %506 = vmatpush1.bf16.msra.mxu0 %v460
        %507 = vmatprep.subr.bf16.mxu0 0
        %508 = vmatpush1.bf16.msra.mxu0 %v461
        %509 = vmatprep.subr.bf16.mxu0 0
        %510 = vmatpush1.bf16.msra.mxu0 %v462
        %511 = vmatprep.mubr.bf16.mxu0 %v380
        %512 = vmatmul.mubr.bf16.gmra.mrb[0].mxu0 %v379
        %v513 = vpop.f32.mrb[0].mxu0
        %v514 = vadd.f32 0.0, %v513
        %v515 = vpop.f32.mrb[0].mxu0
        %v516 = vpop.f32.mrb[0].mxu0
        %v517 = vpop.f32.mrb[0].mxu0
        %518 = vdwg.mxu0
        %v519 = vmul.f32 %v514, %v343
        %v520 = vld [vmem:[#allocation10] sm:$0x1]
        %v521 = vlaneseq
        %v522 = vshrl.u32 %v521, 7
        %v523 = vsub.s32 0, %v522
        %v524 = vrot.slane %v520, %v523
        %v525 = vadd.f32 %v519, %v524
        %v526 = vsub.f32 0.0, %v525
        %v527 = vmul.f32 %v526, 1.442695
        %v528 = vpow.pop %v527
        %v529 = vadd.f32 %v528, 1.0
        %v530 = vrcp.pop %v529
        %v531 = vmul.f32 %v525, %v530
        %532 = vadd.xlane.f32.xlu0 %v531
        %v533 = vpop.xlane.xlu0 %532
        %v534 = vrcp.pop 128.0
        %v535 = vmul.f32 %v533, %v534
        %v536 = vmul.f32 %v531, %v531
        %537 = vadd.xlane.f32.xlu0 %v536
        %v538 = vpop.xlane.xlu0 %537
        %v539 = vmul.f32 %v538, %v534
        %v540 = vmul.f32 %v535, %v535
        %v541 = vsub.f32 %v539, %v540
        %v542 = vld [vmem:[#allocation10 + $0x5] sm:$0x1]
        %v543 = vld [vmem:[#allocation10 + $0xa] sm:$0x1]
        %v544 = vsub.f32 %v531, %v535
        %v545 = vadd.f32 %v541, 0.1
        %v546 = vrsqrt.pop %v545
        %v547 = vmul.f32 %v544, %v546
        %v548 = vlaneseq
        %v549 = vshrl.u32 %v548, 7
        %v550 = vsub.s32 0, %v549
        %v551 = vrot.slane %v542, %v550
        %v552 = vmul.f32 %v547, %v551
        %v553 = vlaneseq
        %v554 = vshrl.u32 %v553, 7
        %v555 = vsub.s32 0, %v554
        %v556 = vrot.slane %v543, %v555
        %v557 = vadd.f32 %v552, %v556
        %v558 = vld [vmem:[#allocation7] sm:$0xf]
        %v559 = vld [vmem:[#allocation7 + $0x4] sm:$0xf]
        %v560 = vld [vmem:[#allocation7 + $0x8] sm:$0xf]
        %v561 = vld [vmem:[#allocation7 + $0xc] sm:$0xf]
        %v562 = vld [vmem:[#allocation7 + $0x10] sm:$0xf]
        %v563 = vld [vmem:[#allocation7 + $0x14] sm:$0xf]
        %v564 = vld [vmem:[#allocation7 + $0x18] sm:$0xf]
        %v565 = vld [vmem:[#allocation7 + $0x1c] sm:$0xf]
        %v566 = vld [vmem:[#allocation7 + $0x20] sm:$0xf]
        %v567 = vld [vmem:[#allocation7 + $0x24] sm:$0xf]
        %v568 = vld [vmem:[#allocation7 + $0x28] sm:$0xf]
        %v569 = vld [vmem:[#allocation7 + $0x2c] sm:$0xf]
        %v570 = vld [vmem:[#allocation7 + $0x30] sm:$0xf]
        %v571 = vld [vmem:[#allocation7 + $0x34] sm:$0xf]
        %v572 = vld [vmem:[#allocation7 + $0x38] sm:$0xf]
        %v573 = vld [vmem:[#allocation7 + $0x3c] sm:$0xf]
        %v574 = vpack.c.bf16 %v557, %v557
        %v575 = vld [vmem:[#allocation10 + $0x1] sm:$0x1]
        %v576 = vlaneseq
        %v577 = vshrl.u32 %v576, 7
        %v578 = vsub.s32 0, %v577
        %v579 = vrot.slane %v575, %v578
        %v596 = vunpack.c.l.b16 %v558
        %v597 = vunpack.c.l.b16 %v559
        %v598 = vunpack.c.l.b16 %v560
        %v599 = vunpack.c.l.b16 %v561
        %v600 = vunpack.c.l.b16 %v562
        %v601 = vunpack.c.l.b16 %v563
        %v602 = vunpack.c.l.b16 %v564
        %v603 = vunpack.c.l.b16 %v565
        %v604 = vunpack.c.l.b16 %v566
        %v605 = vunpack.c.l.b16 %v567
        %v606 = vunpack.c.l.b16 %v568
        %v607 = vunpack.c.l.b16 %v569
        %v608 = vunpack.c.l.b16 %v570
        %v609 = vunpack.c.l.b16 %v571
        %v610 = vunpack.c.l.b16 %v572
        %v611 = vunpack.c.l.b16 %v573
        %v612 = vpack.c.b16 %v597, %v596
        %v613 = vpack.c.b16 %v599, %v598
        %v614 = vpack.c.b16 %v601, %v600
        %v615 = vpack.c.b16 %v603, %v602
        %v616 = vpack.c.b16 %v605, %v604
        %v617 = vpack.c.b16 %v607, %v606
        %v618 = vpack.c.b16 %v609, %v608
        %v619 = vpack.c.b16 %v611, %v610
        %628 = vmatprep.subr.bf16.mxu0 0
        %629 = vmatpush1.bf16.msra.mxu0 %v612
        %630 = vmatprep.subr.bf16.mxu0 0
        %631 = vmatpush1.bf16.msra.mxu0 %v613
        %632 = vmatprep.subr.bf16.mxu0 0
        %633 = vmatpush1.bf16.msra.mxu0 %v614
        %634 = vmatprep.subr.bf16.mxu0 0
        %635 = vmatpush1.bf16.msra.mxu0 %v615
        %636 = vmatprep.subr.bf16.mxu0 0
        %637 = vmatpush1.bf16.msra.mxu0 %v616
        %638 = vmatprep.subr.bf16.mxu0 0
        %639 = vmatpush1.bf16.msra.mxu0 %v617
        %640 = vmatprep.subr.bf16.mxu0 0
        %641 = vmatpush1.bf16.msra.mxu0 %v618
        %642 = vmatprep.subr.bf16.mxu0 0
        %643 = vmatpush1.bf16.msra.mxu0 %v619
        %644 = vmatprep.subr.bf16.mxu0 0
        %645 = vmatpush1.bf16.msra.mxu0 0
        %646 = vmatprep.subr.bf16.mxu0 0
        %647 = vmatpush1.bf16.msra.mxu0 0
        %648 = vmatprep.subr.bf16.mxu0 0
        %649 = vmatpush1.bf16.msra.mxu0 0
        %650 = vmatprep.subr.bf16.mxu0 0
        %651 = vmatpush1.bf16.msra.mxu0 0
        %652 = vmatprep.subr.bf16.mxu0 0
        %653 = vmatpush1.bf16.msra.mxu0 0
        %654 = vmatprep.subr.bf16.mxu0 0
        %655 = vmatpush1.bf16.msra.mxu0 0
        %656 = vmatprep.subr.bf16.mxu0 0
        %657 = vmatpush1.bf16.msra.mxu0 0
        %658 = vmatprep.subr.bf16.mxu0 0
        %659 = vmatpush1.bf16.msra.mxu0 0
        %660 = vmatprep.mubr.bf16.mxu0 0
        %661 = vmatmul.mubr.bf16.gmra.mrb[0].mxu0 %v574
        %v662 = vpop.f32.mrb[0].mxu0
        %v663 = vadd.f32 %v579, %v662
        %v664 = vpop.f32.mrb[0].mxu0
        %v665 = vpop.f32.mrb[0].mxu0
        %v666 = vpop.f32.mrb[0].mxu0
        %667 = vdwg.mxu0
        %v668 = vadd.f32 %v663, %v557
        %v669 = vsub.f32 0.0, %v668
        %v670 = vmul.f32 %v669, 1.442695
        %v671 = vpow.pop %v670
        %v672 = vadd.f32 %v671, 1.0
        %v673 = vrcp.pop %v672
        %v674 = vmul.f32 %v668, %v673
        %675 = vadd.xlane.f32.xlu0 %v674
        %v676 = vpop.xlane.xlu0 %675
        %v677 = vmul.f32 %v676, %v534
        %v678 = vmul.f32 %v674, %v674
        %679 = vadd.xlane.f32.xlu0 %v678
        %v680 = vpop.xlane.xlu0 %679
        %v681 = vmul.f32 %v680, %v534
        %v682 = vmul.f32 %v677, %v677
        %v683 = vsub.f32 %v681, %v682
        %v684 = vld [vmem:[#allocation10 + $0x6] sm:$0x1]
        %v685 = vld [vmem:[#allocation10 + $0xb] sm:$0x1]
        %v686 = vsub.f32 %v674, %v677
        %v687 = vadd.f32 %v683, 0.1
        %v688 = vrsqrt.pop %v687
        %v689 = vmul.f32 %v686, %v688
        %v690 = vlaneseq
        %v691 = vshrl.u32 %v690, 7
        %v692 = vsub.s32 0, %v691
        %v693 = vrot.slane %v684, %v692
        %v694 = vmul.f32 %v689, %v693
        %v695 = vlaneseq
        %v696 = vshrl.u32 %v695, 7
        %v697 = vsub.s32 0, %v696
        %v698 = vrot.slane %v685, %v697
        %v699 = vadd.f32 %v694, %v698
        %v700 = vadd.f32 %v557, %v699
        %s701 = scalar_lea.vmem [#allocation7], 64
        %v702 = vld [vmem:[%s701] sm:$0xf]
        %v703 = vld [vmem:[%s701 + $0x4] sm:$0xf]
        %v704 = vld [vmem:[%s701 + $0x8] sm:$0xf]
        %v705 = vld [vmem:[%s701 + $0xc] sm:$0xf]
        %v706 = vld [vmem:[%s701 + $0x10] sm:$0xf]
        %v707 = vld [vmem:[%s701 + $0x14] sm:$0xf]
        %v708 = vld [vmem:[%s701 + $0x18] sm:$0xf]
        %v709 = vld [vmem:[%s701 + $0x1c] sm:$0xf]
        %v710 = vld [vmem:[%s701 + $0x20] sm:$0xf]
        %v711 = vld [vmem:[%s701 + $0x24] sm:$0xf]
        %v712 = vld [vmem:[%s701 + $0x28] sm:$0xf]
        %v713 = vld [vmem:[%s701 + $0x2c] sm:$0xf]
        %v714 = vld [vmem:[%s701 + $0x30] sm:$0xf]
        %v715 = vld [vmem:[%s701 + $0x34] sm:$0xf]
        %v716 = vld [vmem:[%s701 + $0x38] sm:$0xf]
        %v717 = vld [vmem:[%s701 + $0x3c] sm:$0xf]
        %v718 = vpack.c.bf16 %v699, %v699
        %v719 = vld [vmem:[#allocation10 + $0x2] sm:$0x1]
        %v720 = vlaneseq
        %v721 = vshrl.u32 %v720, 7
        %v722 = vsub.s32 0, %v721
        %v723 = vrot.slane %v719, %v722
        %v740 = vunpack.c.l.b16 %v702
        %v741 = vunpack.c.l.b16 %v703
        %v742 = vunpack.c.l.b16 %v704
        %v743 = vunpack.c.l.b16 %v705
        %v744 = vunpack.c.l.b16 %v706
        %v745 = vunpack.c.l.b16 %v707
        %v746 = vunpack.c.l.b16 %v708
        %v747 = vunpack.c.l.b16 %v709
        %v748 = vunpack.c.l.b16 %v710
        %v749 = vunpack.c.l.b16 %v711
        %v750 = vunpack.c.l.b16 %v712
        %v751 = vunpack.c.l.b16 %v713
        %v752 = vunpack.c.l.b16 %v714
        %v753 = vunpack.c.l.b16 %v715
        %v754 = vunpack.c.l.b16 %v716
        %v755 = vunpack.c.l.b16 %v717
        %v756 = vpack.c.b16 %v741, %v740
        %v757 = vpack.c.b16 %v743, %v742
        %v758 = vpack.c.b16 %v745, %v744
        %v759 = vpack.c.b16 %v747, %v746
        %v760 = vpack.c.b16 %v749, %v748
        %v761 = vpack.c.b16 %v751, %v750
        %v762 = vpack.c.b16 %v753, %v752
        %v763 = vpack.c.b16 %v755, %v754
        %772 = vmatprep.subr.bf16.mxu0 0
        %773 = vmatpush1.bf16.msra.mxu0 %v756
        %774 = vmatprep.subr.bf16.mxu0 0
        %775 = vmatpush1.bf16.msra.mxu0 %v757
        %776 = vmatprep.subr.bf16.mxu0 0
        %777 = vmatpush1.bf16.msra.mxu0 %v758
        %778 = vmatprep.subr.bf16.mxu0 0
        %779 = vmatpush1.bf16.msra.mxu0 %v759
        %780 = vmatprep.subr.bf16.mxu0 0
        %781 = vmatpush1.bf16.msra.mxu0 %v760
        %782 = vmatprep.subr.bf16.mxu0 0
        %783 = vmatpush1.bf16.msra.mxu0 %v761
        %784 = vmatprep.subr.bf16.mxu0 0
        %785 = vmatpush1.bf16.msra.mxu0 %v762
        %786 = vmatprep.subr.bf16.mxu0 0
        %787 = vmatpush1.bf16.msra.mxu0 %v763
        %788 = vmatprep.subr.bf16.mxu0 0
        %789 = vmatpush1.bf16.msra.mxu0 0
        %790 = vmatprep.subr.bf16.mxu0 0
        %791 = vmatpush1.bf16.msra.mxu0 0
        %792 = vmatprep.subr.bf16.mxu0 0
        %793 = vmatpush1.bf16.msra.mxu0 0
        %794 = vmatprep.subr.bf16.mxu0 0
        %795 = vmatpush1.bf16.msra.mxu0 0
        %796 = vmatprep.subr.bf16.mxu0 0
        %797 = vmatpush1.bf16.msra.mxu0 0
        %798 = vmatprep.subr.bf16.mxu0 0
        %799 = vmatpush1.bf16.msra.mxu0 0
        %800 = vmatprep.subr.bf16.mxu0 0
        %801 = vmatpush1.bf16.msra.mxu0 0
        %802 = vmatprep.subr.bf16.mxu0 0
        %803 = vmatpush1.bf16.msra.mxu0 0
        %804 = vmatprep.mubr.bf16.mxu0 0
        %805 = vmatmul.mubr.bf16.gmra.mrb[0].mxu0 %v718
        %v806 = vpop.f32.mrb[0].mxu0
        %v807 = vadd.f32 %v723, %v806
        %v808 = vpop.f32.mrb[0].mxu0
        %v809 = vpop.f32.mrb[0].mxu0
        %v810 = vpop.f32.mrb[0].mxu0
        %811 = vdwg.mxu0
        %v812 = vadd.f32 %v807, %v700
        %v813 = vsub.f32 0.0, %v812
        %v814 = vmul.f32 %v813, 1.442695
        %v815 = vpow.pop %v814
        %v816 = vadd.f32 %v815, 1.0
        %v817 = vrcp.pop %v816
        %v818 = vmul.f32 %v812, %v817
        %819 = vadd.xlane.f32.xlu0 %v818
        %v820 = vpop.xlane.xlu0 %819
        %v821 = vmul.f32 %v820, %v534
        %v822 = vmul.f32 %v818, %v818
        %823 = vadd.xlane.f32.xlu0 %v822
        %v824 = vpop.xlane.xlu0 %823
        %v825 = vmul.f32 %v824, %v534
        %v826 = vmul.f32 %v821, %v821
        %v827 = vsub.f32 %v825, %v826
        %v828 = vld [vmem:[#allocation10 + $0x7] sm:$0x1]
        %v829 = vld [vmem:[#allocation10 + $0xc] sm:$0x1]
        %v830 = vsub.f32 %v818, %v821
        %v831 = vadd.f32 %v827, 0.1
        %v832 = vrsqrt.pop %v831
        %v833 = vmul.f32 %v830, %v832
        %v834 = vlaneseq
        %v835 = vshrl.u32 %v834, 7
        %v836 = vsub.s32 0, %v835
        %v837 = vrot.slane %v828, %v836
        %v838 = vmul.f32 %v833, %v837
        %v839 = vlaneseq
        %v840 = vshrl.u32 %v839, 7
        %v841 = vsub.s32 0, %v840
        %v842 = vrot.slane %v829, %v841
        %v843 = vadd.f32 %v838, %v842
        %v844 = vadd.f32 %v700, %v843
        %s845 = scalar_lea.vmem [#allocation7], 128
        %v846 = vld [vmem:[%s845] sm:$0xf]
        %v847 = vld [vmem:[%s845 + $0x4] sm:$0xf]
        %v848 = vld [vmem:[%s845 + $0x8] sm:$0xf]
        %v849 = vld [vmem:[%s845 + $0xc] sm:$0xf]
        %v850 = vld [vmem:[%s845 + $0x10] sm:$0xf]
        %v851 = vld [vmem:[%s845 + $0x14] sm:$0xf]
        %v852 = vld [vmem:[%s845 + $0x18] sm:$0xf]
        %v853 = vld [vmem:[%s845 + $0x1c] sm:$0xf]
        %v854 = vld [vmem:[%s845 + $0x20] sm:$0xf]
        %v855 = vld [vmem:[%s845 + $0x24] sm:$0xf]
        %v856 = vld [vmem:[%s845 + $0x28] sm:$0xf]
        %v857 = vld [vmem:[%s845 + $0x2c] sm:$0xf]
        %v858 = vld [vmem:[%s845 + $0x30] sm:$0xf]
        %v859 = vld [vmem:[%s845 + $0x34] sm:$0xf]
        %v860 = vld [vmem:[%s845 + $0x38] sm:$0xf]
        %v861 = vld [vmem:[%s845 + $0x3c] sm:$0xf]
        %v862 = vpack.c.bf16 %v843, %v843
        %v863 = vld [vmem:[#allocation10 + $0x3] sm:$0x1]
        %v864 = vlaneseq
        %v865 = vshrl.u32 %v864, 7
        %v866 = vsub.s32 0, %v865
        %v867 = vrot.slane %v863, %v866
        %v884 = vunpack.c.l.b16 %v846
        %v885 = vunpack.c.l.b16 %v847
        %v886 = vunpack.c.l.b16 %v848
        %v887 = vunpack.c.l.b16 %v849
        %v888 = vunpack.c.l.b16 %v850
        %v889 = vunpack.c.l.b16 %v851
        %v890 = vunpack.c.l.b16 %v852
        %v891 = vunpack.c.l.b16 %v853
        %v892 = vunpack.c.l.b16 %v854
        %v893 = vunpack.c.l.b16 %v855
        %v894 = vunpack.c.l.b16 %v856
        %v895 = vunpack.c.l.b16 %v857
        %v896 = vunpack.c.l.b16 %v858
        %v897 = vunpack.c.l.b16 %v859
        %v898 = vunpack.c.l.b16 %v860
        %v899 = vunpack.c.l.b16 %v861
        %v900 = vpack.c.b16 %v885, %v884
        %v901 = vpack.c.b16 %v887, %v886
        %v902 = vpack.c.b16 %v889, %v888
        %v903 = vpack.c.b16 %v891, %v890
        %v904 = vpack.c.b16 %v893, %v892
        %v905 = vpack.c.b16 %v895, %v894
        %v906 = vpack.c.b16 %v897, %v896
        %v907 = vpack.c.b16 %v899, %v898
        %916 = vmatprep.subr.bf16.mxu0 0
        %917 = vmatpush1.bf16.msra.mxu0 %v900
        %918 = vmatprep.subr.bf16.mxu0 0
        %919 = vmatpush1.bf16.msra.mxu0 %v901
        %920 = vmatprep.subr.bf16.mxu0 0
        %921 = vmatpush1.bf16.msra.mxu0 %v902
        %922 = vmatprep.subr.bf16.mxu0 0
        %923 = vmatpush1.bf16.msra.mxu0 %v903
        %924 = vmatprep.subr.bf16.mxu0 0
        %925 = vmatpush1.bf16.msra.mxu0 %v904
        %926 = vmatprep.subr.bf16.mxu0 0
        %927 = vmatpush1.bf16.msra.mxu0 %v905
        %928 = vmatprep.subr.bf16.mxu0 0
        %929 = vmatpush1.bf16.msra.mxu0 %v906
        %930 = vmatprep.subr.bf16.mxu0 0
        %931 = vmatpush1.bf16.msra.mxu0 %v907
        %932 = vmatprep.subr.bf16.mxu0 0
        %933 = vmatpush1.bf16.msra.mxu0 0
        %934 = vmatprep.subr.bf16.mxu0 0
        %935 = vmatpush1.bf16.msra.mxu0 0
        %936 = vmatprep.subr.bf16.mxu0 0
        %937 = vmatpush1.bf16.msra.mxu0 0
        %938 = vmatprep.subr.bf16.mxu0 0
        %939 = vmatpush1.bf16.msra.mxu0 0
        %940 = vmatprep.subr.bf16.mxu0 0
        %941 = vmatpush1.bf16.msra.mxu0 0
        %942 = vmatprep.subr.bf16.mxu0 0
        %943 = vmatpush1.bf16.msra.mxu0 0
        %944 = vmatprep.subr.bf16.mxu0 0
        %945 = vmatpush1.bf16.msra.mxu0 0
        %946 = vmatprep.subr.bf16.mxu0 0
        %947 = vmatpush1.bf16.msra.mxu0 0
        %948 = vmatprep.mubr.bf16.mxu0 0
        %949 = vmatmul.mubr.bf16.gmra.mrb[0].mxu0 %v862
        %v950 = vpop.f32.mrb[0].mxu0
        %v951 = vadd.f32 %v867, %v950
        %v952 = vpop.f32.mrb[0].mxu0
        %v953 = vpop.f32.mrb[0].mxu0
        %v954 = vpop.f32.mrb[0].mxu0
        %955 = vdwg.mxu0
        %v956 = vadd.f32 %v951, %v844
        %v957 = vsub.f32 0.0, %v956
        %v958 = vmul.f32 %v957, 1.442695
        %v959 = vpow.pop %v958
        %v960 = vadd.f32 %v959, 1.0
        %v961 = vrcp.pop %v960
        %v962 = vmul.f32 %v956, %v961
        %963 = vadd.xlane.f32.xlu0 %v962
        %v964 = vpop.xlane.xlu0 %963
        %v965 = vmul.f32 %v964, %v534
        %v966 = vmul.f32 %v962, %v962
        %967 = vadd.xlane.f32.xlu0 %v966
        %v968 = vpop.xlane.xlu0 %967
        %v969 = vmul.f32 %v968, %v534
        %v970 = vmul.f32 %v965, %v965
        %v971 = vsub.f32 %v969, %v970
        %v972 = vld [vmem:[#allocation10 + $0x8] sm:$0x1]
        %v973 = vld [vmem:[#allocation10 + $0xd] sm:$0x1]
        %v974 = vsub.f32 %v962, %v965
        %v975 = vadd.f32 %v971, 0.1
        %v976 = vrsqrt.pop %v975
        %v977 = vmul.f32 %v974, %v976
        %v978 = vlaneseq
        %v979 = vshrl.u32 %v978, 7
        %v980 = vsub.s32 0, %v979
        %v981 = vrot.slane %v972, %v980
        %v982 = vmul.f32 %v977, %v981
        %v983 = vlaneseq
        %v984 = vshrl.u32 %v983, 7
        %v985 = vsub.s32 0, %v984
        %v986 = vrot.slane %v973, %v985
        %v987 = vadd.f32 %v982, %v986
        %v988 = vadd.f32 %v844, %v987
        %s989 = scalar_lea.vmem [#allocation7], 192
        %v990 = vld [vmem:[%s989] sm:$0xf]
        %v991 = vld [vmem:[%s989 + $0x4] sm:$0xf]
        %v992 = vld [vmem:[%s989 + $0x8] sm:$0xf]
        %v993 = vld [vmem:[%s989 + $0xc] sm:$0xf]
        %v994 = vld [vmem:[%s989 + $0x10] sm:$0xf]
        %v995 = vld [vmem:[%s989 + $0x14] sm:$0xf]
        %v996 = vld [vmem:[%s989 + $0x18] sm:$0xf]
        %v997 = vld [vmem:[%s989 + $0x1c] sm:$0xf]
        %v998 = vld [vmem:[%s989 + $0x20] sm:$0xf]
        %v999 = vld [vmem:[%s989 + $0x24] sm:$0xf]
        %v1000 = vld [vmem:[%s989 + $0x28] sm:$0xf]
        %v1001 = vld [vmem:[%s989 + $0x2c] sm:$0xf]
        %v1002 = vld [vmem:[%s989 + $0x30] sm:$0xf]
        %v1003 = vld [vmem:[%s989 + $0x34] sm:$0xf]
        %v1004 = vld [vmem:[%s989 + $0x38] sm:$0xf]
        %v1005 = vld [vmem:[%s989 + $0x3c] sm:$0xf]
        %v1006 = vpack.c.bf16 %v987, %v987
        %v1007 = vld [vmem:[#allocation10 + $0x4] sm:$0x1]
        %v1008 = vlaneseq
        %v1009 = vshrl.u32 %v1008, 7
        %v1010 = vsub.s32 0, %v1009
        %v1011 = vrot.slane %v1007, %v1010
        %v1028 = vunpack.c.l.b16 %v990
        %v1029 = vunpack.c.l.b16 %v991
        %v1030 = vunpack.c.l.b16 %v992
        %v1031 = vunpack.c.l.b16 %v993
        %v1032 = vunpack.c.l.b16 %v994
        %v1033 = vunpack.c.l.b16 %v995
        %v1034 = vunpack.c.l.b16 %v996
        %v1035 = vunpack.c.l.b16 %v997
        %v1036 = vunpack.c.l.b16 %v998
        %v1037 = vunpack.c.l.b16 %v999
        %v1038 = vunpack.c.l.b16 %v1000
        %v1039 = vunpack.c.l.b16 %v1001
        %v1040 = vunpack.c.l.b16 %v1002
        %v1041 = vunpack.c.l.b16 %v1003
        %v1042 = vunpack.c.l.b16 %v1004
        %v1043 = vunpack.c.l.b16 %v1005
        %v1044 = vpack.c.b16 %v1029, %v1028
        %v1045 = vpack.c.b16 %v1031, %v1030
        %v1046 = vpack.c.b16 %v1033, %v1032
        %v1047 = vpack.c.b16 %v1035, %v1034
        %v1048 = vpack.c.b16 %v1037, %v1036
        %v1049 = vpack.c.b16 %v1039, %v1038
        %v1050 = vpack.c.b16 %v1041, %v1040
        %v1051 = vpack.c.b16 %v1043, %v1042
        %1060 = vmatprep.subr.bf16.mxu0 0
        %1061 = vmatpush1.bf16.msra.mxu0 %v1044
        %1062 = vmatprep.subr.bf16.mxu0 0
        %1063 = vmatpush1.bf16.msra.mxu0 %v1045
        %1064 = vmatprep.subr.bf16.mxu0 0
        %1065 = vmatpush1.bf16.msra.mxu0 %v1046
        %1066 = vmatprep.subr.bf16.mxu0 0
        %1067 = vmatpush1.bf16.msra.mxu0 %v1047
        %1068 = vmatprep.subr.bf16.mxu0 0
        %1069 = vmatpush1.bf16.msra.mxu0 %v1048
        %1070 = vmatprep.subr.bf16.mxu0 0
        %1071 = vmatpush1.bf16.msra.mxu0 %v1049
        %1072 = vmatprep.subr.bf16.mxu0 0
        %1073 = vmatpush1.bf16.msra.mxu0 %v1050
        %1074 = vmatprep.subr.bf16.mxu0 0
        %1075 = vmatpush1.bf16.msra.mxu0 %v1051
        %1076 = vmatprep.subr.bf16.mxu0 0
        %1077 = vmatpush1.bf16.msra.mxu0 0
        %1078 = vmatprep.subr.bf16.mxu0 0
        %1079 = vmatpush1.bf16.msra.mxu0 0
        %1080 = vmatprep.subr.bf16.mxu0 0
        %1081 = vmatpush1.bf16.msra.mxu0 0
        %1082 = vmatprep.subr.bf16.mxu0 0
        %1083 = vmatpush1.bf16.msra.mxu0 0
        %1084 = vmatprep.subr.bf16.mxu0 0
        %1085 = vmatpush1.bf16.msra.mxu0 0
        %1086 = vmatprep.subr.bf16.mxu0 0
        %1087 = vmatpush1.bf16.msra.mxu0 0
        %1088 = vmatprep.subr.bf16.mxu0 0
        %1089 = vmatpush1.bf16.msra.mxu0 0
        %1090 = vmatprep.subr.bf16.mxu0 0
        %1091 = vmatpush1.bf16.msra.mxu0 0
        %1092 = vmatprep.mubr.bf16.mxu0 0
        %1093 = vmatmul.mubr.bf16.gmra.mrb[0].mxu0 %v1006
        %v1094 = vpop.f32.mrb[0].mxu0
        %v1095 = vadd.f32 %v1011, %v1094
        %v1096 = vpop.f32.mrb[0].mxu0
        %v1097 = vpop.f32.mrb[0].mxu0
        %v1098 = vpop.f32.mrb[0].mxu0
        %1099 = vdwg.mxu0
        %v1100 = vadd.f32 %v1095, %v988
        %v1101 = vsub.f32 0.0, %v1100
        %v1102 = vmul.f32 %v1101, 1.442695
        %v1103 = vpow.pop %v1102
        %v1104 = vadd.f32 %v1103, 1.0
        %v1105 = vrcp.pop %v1104
        %v1106 = vmul.f32 %v1100, %v1105
        %1107 = vadd.xlane.f32.xlu0 %v1106
        %v1108 = vpop.xlane.xlu0 %1107
        %v1109 = vmul.f32 %v1108, %v534
        %v1110 = vmul.f32 %v1106, %v1106
        %1111 = vadd.xlane.f32.xlu0 %v1110
        %v1112 = vpop.xlane.xlu0 %1111
        %v1113 = vmul.f32 %v1112, %v534
        %v1114 = vmul.f32 %v1109, %v1109
        %v1115 = vsub.f32 %v1113, %v1114
        %v1116 = vld [vmem:[#allocation10 + $0x9] sm:$0x1]
        %v1117 = vld [vmem:[#allocation10 + $0xe] sm:$0x1]
        %v1118 = vsub.f32 %v1106, %v1109
        %v1119 = vadd.f32 %v1115, 0.1
        %v1120 = vrsqrt.pop %v1119
        %v1121 = vmul.f32 %v1118, %v1120
        %v1122 = vlaneseq
        %v1123 = vshrl.u32 %v1122, 7
        %v1124 = vsub.s32 0, %v1123
        %v1125 = vrot.slane %v1116, %v1124
        %v1126 = vmul.f32 %v1121, %v1125
        %v1127 = vlaneseq
        %v1128 = vshrl.u32 %v1127, 7
        %v1129 = vsub.s32 0, %v1128
        %v1130 = vrot.slane %v1117, %v1129
        %v1131 = vadd.f32 %v1126, %v1130
        %v1132 = vld [vmem:[#allocation8] sm:$0xf]
        %v1133 = vld [vmem:[#allocation8 + $0x4] sm:$0xf]
        %v1134 = vld [vmem:[#allocation8 + $0x8] sm:$0xf]
        %v1135 = vld [vmem:[#allocation8 + $0xc] sm:$0xf]
        %v1136 = vld [vmem:[#allocation8 + $0x10] sm:$0xf]
        %v1137 = vld [vmem:[#allocation8 + $0x14] sm:$0xf]
        %v1138 = vld [vmem:[#allocation8 + $0x18] sm:$0xf]
        %v1139 = vld [vmem:[#allocation8 + $0x1c] sm:$0xf]
        %v1140 = vld [vmem:[#allocation8 + $0x20] sm:$0xf]
        %v1141 = vld [vmem:[#allocation8 + $0x24] sm:$0xf]
        %v1142 = vld [vmem:[#allocation8 + $0x28] sm:$0xf]
        %v1143 = vld [vmem:[#allocation8 + $0x2c] sm:$0xf]
        %v1144 = vld [vmem:[#allocation8 + $0x30] sm:$0xf]
        %v1145 = vld [vmem:[#allocation8 + $0x34] sm:$0xf]
        %v1146 = vld [vmem:[#allocation8 + $0x38] sm:$0xf]
        %v1147 = vld [vmem:[#allocation8 + $0x3c] sm:$0xf]
        %v1148 = vpack.c.bf16 %v1131, %v1131
        %v1149 = vld [vmem:[%s5] sm:$0x1]
        %v1151 = vlaneseq
        %v1152 = vshrl.u32 %v1151, 7
        %v1153 = vsub.s32 0, %v1152
        %v1154 = vrot.slane %v1149, %v1153
        %v1172 = vunpack.c.l.b16 %v1132
        %v1173 = vunpack.c.l.b16 %v1133
        %v1174 = vunpack.c.l.b16 %v1134
        %v1175 = vunpack.c.l.b16 %v1135
        %v1176 = vunpack.c.l.b16 %v1136
        %v1177 = vunpack.c.l.b16 %v1137
        %v1178 = vunpack.c.l.b16 %v1138
        %v1179 = vunpack.c.l.b16 %v1139
        %v1180 = vunpack.c.l.b16 %v1140
        %v1181 = vunpack.c.l.b16 %v1141
        %v1182 = vunpack.c.l.b16 %v1142
        %v1183 = vunpack.c.l.b16 %v1143
        %v1184 = vunpack.c.l.b16 %v1144
        %v1185 = vunpack.c.l.b16 %v1145
        %v1186 = vunpack.c.l.b16 %v1146
        %v1187 = vunpack.c.l.b16 %v1147
        %v1188 = vpack.c.b16 %v1173, %v1172
        %v1189 = vpack.c.b16 %v1175, %v1174
        %v1190 = vpack.c.b16 %v1177, %v1176
        %v1191 = vpack.c.b16 %v1179, %v1178
        %v1192 = vpack.c.b16 %v1181, %v1180
        %v1193 = vpack.c.b16 %v1183, %v1182
        %v1194 = vpack.c.b16 %v1185, %v1184
        %v1195 = vpack.c.b16 %v1187, %v1186
        %1204 = vmatprep.subr.bf16.mxu0 0
        %1205 = vmatpush1.bf16.msra.mxu0 %v1188
        %1206 = vmatprep.subr.bf16.mxu0 0
        %1207 = vmatpush1.bf16.msra.mxu0 %v1189
        %1208 = vmatprep.subr.bf16.mxu0 0
        %1209 = vmatpush1.bf16.msra.mxu0 %v1190
        %1210 = vmatprep.subr.bf16.mxu0 0
        %1211 = vmatpush1.bf16.msra.mxu0 %v1191
        %1212 = vmatprep.subr.bf16.mxu0 0
        %1213 = vmatpush1.bf16.msra.mxu0 %v1192
        %1214 = vmatprep.subr.bf16.mxu0 0
        %1215 = vmatpush1.bf16.msra.mxu0 %v1193
        %1216 = vmatprep.subr.bf16.mxu0 0
        %1217 = vmatpush1.bf16.msra.mxu0 %v1194
        %1218 = vmatprep.subr.bf16.mxu0 0
        %1219 = vmatpush1.bf16.msra.mxu0 %v1195
        %1220 = vmatprep.subr.bf16.mxu0 0
        %1221 = vmatpush1.bf16.msra.mxu0 0
        %1222 = vmatprep.subr.bf16.mxu0 0
        %1223 = vmatpush1.bf16.msra.mxu0 0
        %1224 = vmatprep.subr.bf16.mxu0 0
        %1225 = vmatpush1.bf16.msra.mxu0 0
        %1226 = vmatprep.subr.bf16.mxu0 0
        %1227 = vmatpush1.bf16.msra.mxu0 0
        %1228 = vmatprep.subr.bf16.mxu0 0
        %1229 = vmatpush1.bf16.msra.mxu0 0
        %1230 = vmatprep.subr.bf16.mxu0 0
        %1231 = vmatpush1.bf16.msra.mxu0 0
        %1232 = vmatprep.subr.bf16.mxu0 0
        %1233 = vmatpush1.bf16.msra.mxu0 0
        %1234 = vmatprep.subr.bf16.mxu0 0
        %1235 = vmatpush1.bf16.msra.mxu0 0
        %1236 = vmatprep.mubr.bf16.mxu0 0
        %1237 = vmatmul.mubr.bf16.gmra.mrb[0].mxu0 %v1148
        %v1238 = vpop.f32.mrb[0].mxu0
        %v1239 = vadd.f32 %v1154, %v1238
        %v1240 = vpop.f32.mrb[0].mxu0
        %v1241 = vpop.f32.mrb[0].mxu0
        %v1242 = vpop.f32.mrb[0].mxu0
        %1243 = vdwg.mxu0
        %v1244 = vlaneseq
        %v1245 = vand.u32 %v1244, 127
        %vm1246 = vcmp.ge.s32.totalorder %v1245, 64
        %v1247 = vmax.f32 %v1239, -6.0
        %v1248 = vmin.f32 %v1247, 6.0
        %v1249 = vsel %vm1246, 1, 0
        %vm1250 = vcmp.eq.s32.totalorder %v1249, 1
        %v1251 = vsel %vm1250, %v1248, %v1239
        %1252 = vst [vmem:[%s325] sm:$0xff] %v1251
        %s1253 = sand.u32 %s164, 1
        %s1254 = scalar_lea.sflag [#allocation4], %s1253
        %s1255 = sand.u32 %s164, 1
        %s1256 = smul.addr %s1255, 8
        %s1257 = scalar_lea.vmem [#allocation11], %s1256
        // Predicated region
        $region65: #{tpu_custom_call.1} parent=43 // pred_check
          %p1258 = pneg %p174
        $region66: #{tpu_custom_call.1} parent=43 // pred_check_branch
          %1260 = sbr.rel (%p1258) target = $region68
        $region67: #{tpu_custom_call.1} parent=43 // pred_region
          %s1262 = ssub.s32 128, 128
          %1263 = vsyncadd %s1254, %s1262
          %s1264 = smul.addr %s25, 128
          %s1265 = scalar_lea.hbm %s6, %s1264
          %s1267 = sshll.u32 %s1257, 4
          %s1268 = int_to_ptr.vmem [resolvable:$true] %s1267
          %1270 = dma.vmem_to_hbm [thread:$0]  %s1268, 128, %s1265, %s1254
        $region68: #{tpu_custom_call.1} parent=43 // pred_fallthru
          _
      $region44: #{tpu_custom_call.1} parent=5 // pred_fallthru
        _
      %p1271 = scmp.le.s32.totalorder 2, %s20
      // Predicated region
      $region69: #{tpu_custom_call.1} parent=5 // pred_check
        %p1272 = pneg %p1271
      $region70: #{tpu_custom_call.1} parent=5 // pred_check_branch
        %1274 = sbr.rel (%p1272) target = $region72
      $region71: #{tpu_custom_call.1} parent=5 // pred_region
        %s1275 = ssub.s32 %s20, 2
        // Predicated region
        $region73: #{tpu_custom_call.1} parent=71 // pred_check
          %p1276 = pneg %p180
        $region74: #{tpu_custom_call.1} parent=71 // pred_check_branch
          %1278 = sbr.rel (%p1276) target = $region76
        $region75: #{tpu_custom_call.1} parent=71 // pred_region
          %s1279 = sand.u32 %s165, 1
          %s1280 = scalar_lea.sflag [#allocation4], %s1279
          %s1281 = sand.u32 %s165, 1
          %s1282 = smul.addr %s1281, 8
          %s1283 = scalar_lea.vmem [#allocation11], %s1282
          %1284 = dma.done %s1280, 128
        $region76: #{tpu_custom_call.1} parent=71 // pred_fallthru
          _
      $region72: #{tpu_custom_call.1} parent=5 // pred_fallthru
        _
    $region6: #{tpu_custom_call.1} parent=1 // loop_footer
      %s24 = sadd.s32 1, %s20
    $region7: #{tpu_custom_call.1} parent=1 // loop_footer_branch
      %19 = sbr.rel target = $region3
    $region8: #{tpu_custom_call.1} parent=1 // loop_exit
      _
    %1285 = vsyncpa [#allocation3], 1
    %s1286 = scalar_lea.sflag [#allocation3], 1
    %1287 = vsyncpa %s1286, 1
    %1288 = vsyncpa [#allocation6], 1
    %1289 = vsyncpa [#allocation9], 1
    %1290 = vsyncpa [#allocation4], 1
    %s1291 = scalar_lea.sflag [#allocation4], 1
    %1292 = vsyncpa %s1291, 1

</llo_original>
